<compile_context>
chip_gen: v7x
topology: tpu7x:2x2x1
jax: 0.10.0
libtpu: 0.0.40
codegen_flags: <defaults>
</compile_context>

<pallas_src>
import functools

import jax
import jax.numpy as jnp
from jax import lax
from jax.experimental import pallas as pl
from jax.experimental.pallas import tpu as pltpu

EPSILON = 1e-9


# ---------------------------------------------------------------------------
# Fused kernel: distances -> median -> hidden kernel -> DDC1 / DDC2 / DDC3.
# ---------------------------------------------------------------------------
def _ddc_loss_kernel(x_ref, a_ref, o_ref, *, rel_sigma):
    eps = EPSILON
    x = x_ref[...]                                   # (n, d) hidden, MXU dtype
    a = a_ref[...].astype(jnp.float32)               # (n, k) cluster assignments
    n, k = a.shape

    # ---- relu(squared pairwise distances) of the hidden representation ----
    xxT = lax.dot_general(x, x, (((1,), (1,)), ((), ())),
                          preferred_element_type=jnp.float32)         # (n, n)
    xf = x.astype(jnp.float32)
    xsq = xf * xf                                                     # (n, d)
    x2_col = jnp.sum(xsq, axis=1, keepdims=True)                      # (n, 1)
    ones_row = jnp.ones((1, xsq.shape[1]), jnp.float32)
    x2_row = lax.dot_general(ones_row, xsq, (((1,), (1,)), ((), ())),
                             preferred_element_type=jnp.float32)      # (1, n)
    dist = jnp.maximum(x2_col - 2.0 * xxT + x2_row, 0.0)              # (n, n) >= 0

    # ---- exact torch.median (lower middle element) via radix select ----
    # dist >= 0, so its f32 bit patterns reinterpreted as int32 form a monotone,
    # non-negative map of the values: the k_rank-th smallest bit pattern is the
    # bit pattern of the k_rank-th smallest distance.
    u = pltpu.bitcast(dist, jnp.int32)                                # (n, n)
    k_rank = (n * n - 1) // 2                        # 0-indexed lower median
    ans = jnp.zeros((1, 1), jnp.int32)
    for b in range(30, -1, -1):                      # bit 31 (sign) is always 0
        t = ans | jnp.int32(1 << b)
        cnt = jnp.sum((u < t).astype(jnp.int32), keepdims=True)       # (1, 1)
        # answer >= t  <=>  #(x < t) <= k_rank
        ans = jnp.where(cnt <= k_rank, t, ans)
    median = pltpu.bitcast(ans, jnp.float32)                          # (1, 1)

    # ---- hidden kernel matrix: exp(-dist / (2 * sigma2)) ----
    sigma2 = jnp.maximum(jnp.float32(rel_sigma) * median, eps)        # clamp(min=eps)
    scale = jnp.float32(-0.5) / sigma2                                # (1, 1)
    K = jnp.exp(dist * scale)                                         # (n, n)

    # ---- DDC3 assignment-vs-identity kernel: m = exp(-(||a_i||^2 - 2 a_ij + 1)) ----
    a_sq = a * a
    a2 = jnp.sum(a_sq, axis=1, keepdims=True)                         # (n, 1)
    m = jnp.exp(-(a2 - 2.0 * a + 1.0))                                # (n, k)

    # ---- Fused d_cs(A, K) and d_cs(M, K): a single K @ [A|M] MXU pass ----
    am = jnp.concatenate([a, m], axis=1)                              # (n, 2k)
    kam = jnp.dot(K, am, preferred_element_type=jnp.float32)          # (n, 2k)
    nom_full = lax.dot_general(am, kam, (((0,), (0,)), ((), ())),
                               preferred_element_type=jnp.float32)    # (2k, 2k)
    # diag(nom): row form from a cheap elementwise reduce ...
    diag_row_full = jnp.sum(am * kam, axis=0, keepdims=True)          # (1, 2k)
    # ... column (sublane) form extracted from the tiny (2k,2k) nom tile.
    r2 = lax.broadcasted_iota(jnp.int32, (2 * k, 2 * k), 0)
    c2 = lax.broadcasted_iota(jnp.int32, (2 * k, 2 * k), 1)
    eye2k = (r2 == c2).astype(jnp.float32)
    diag_col_full = jnp.sum(nom_full * eye2k, axis=1, keepdims=True)  # (2k, 1)

    def d_cs(nom, diag_col, diag_row):
        # nom (k,k) symmetric; diag_col (k,1); diag_row (1,k) == diag(nom).
        dnom_sq = diag_col * diag_row                        # outer product via broadcast
        nom_c = jnp.where(nom < eps, eps, nom)               # _atleast_epsilon
        dnom_c = jnp.where(dnom_sq < eps * eps, eps * eps, dnom_sq)
        frac = nom_c * lax.rsqrt(dnom_c)                     # (k,k) symmetric
        # triu(frac, diag=1).sum() == 0.5 * (frac.sum() - trace(frac)); the
        # diagonal terms use the same eps clamps as the reference.
        dr_c = jnp.where(diag_row < eps, eps, diag_row)
        drr = diag_row * diag_row
        drr_c = jnp.where(drr < eps * eps, eps * eps, drr)
        diag_frac = dr_c * lax.rsqrt(drr_c)                  # (1, k)
        tri = jnp.sum(frac, keepdims=True) - jnp.sum(diag_frac, keepdims=True)
        return tri / (k * (k - 1))       # == 2/(k(k-1)) * 0.5 * tri, shape (1,1)

    l1 = d_cs(nom_full[:k, :k], diag_col_full[:k, :], diag_row_full[:, :k])
    l3 = d_cs(nom_full[k:, k:], diag_col_full[k:, :], diag_row_full[:, k:])

    # ---- DDC2 without the (n,n) A@A.T: triu = 0.5*(||colsum||^2 - ||A||_F^2) ----
    colsum = jnp.sum(a, axis=0, keepdims=True)               # (1, k)
    l2 = (jnp.sum(colsum * colsum, keepdims=True)
          - jnp.sum(a_sq, keepdims=True)) / (n * (n - 1))    # (1, 1)

    # Single lane-dense output row (unmasked store): lanes 0,1,2 = ddc_1/2/3.
    lane = lax.broadcasted_iota(jnp.int32, (1, 128), 1)
    o_ref[...] = (l1 * (lane == 0).astype(jnp.float32)
                  + l2 * (lane == 1).astype(jnp.float32)
                  + l3 * (lane == 2).astype(jnp.float32))


def ddc_losses(hidden, assignments, rel_sigma):
    """Returns (ddc_1, ddc_2, ddc_3) as f32 scalars."""
    # TODO(synk): for very large batch n (esp. v7x, 64 MiB VMEM) tile the
    # distance / kernel matrix over (row_block, col_block) instead of holding
    # the full (n,n) block resident in VMEM.
    kernel = functools.partial(_ddc_loss_kernel, rel_sigma=float(rel_sigma))
    out = pl.pallas_call(
        kernel,
        out_shape=jax.ShapeDtypeStruct((1, 128), jnp.float32),
        in_specs=[
            pl.BlockSpec(memory_space=pltpu.MemorySpace.VMEM),   # hidden (n, d)
            pl.BlockSpec(memory_space=pltpu.MemorySpace.VMEM),   # A (n, k)
        ],
        out_specs=pl.BlockSpec(memory_space=pltpu.MemorySpace.VMEM),
    )(hidden, assignments)
    return out[0, 0], out[0, 1], out[0, 2]


# ---------------------------------------------------------------------------
# Loss.forward equivalent (Python / plain-JAX glue mirroring nn.Module logic).
# ---------------------------------------------------------------------------
class LossCfg:
    funcs = "ddc_1|ddc_2|ddc_3"
    weights = None          # -> unit weights
    n_clusters = 4
    rel_sigma = 0.15


def loss_forward(cfg, output_0, hidden):
    """output_0: (n, n_clusters) cluster assignments; hidden: (n, d) features."""
    l1, l2, l3 = ddc_losses(hidden, output_0, cfg.rel_sigma)

    names = cfg.funcs.split("|")
    weights = cfg.weights if cfg.weights is not None else len(names) * [1]
    term_vals = {"ddc_1": l1, "ddc_2": l2, "ddc_3": l3}
    loss_values = {name: w * term_vals[name] for name, w in zip(names, weights)}
    loss_values["tot"] = sum(loss_values[name] for name in loss_values)
    return loss_values


if __name__ == "__main__":
    key = jax.random.PRNGKey(0)
    k1, k2 = jax.random.split(key)

    n, dim, n_clusters = 32, 16, 4
    hidden = jax.random.normal(k1, (n, dim), dtype=jnp.float32)          # net.hidden
    logits = jax.random.normal(k2, (n, n_clusters), dtype=jnp.float32)
    output_0 = jax.nn.softmax(logits, axis=1)                            # net.output[0]

    cfg = LossCfg()
    losses = loss_forward(cfg, output_0, hidden)
    jax.block_until_ready(losses["tot"])
    print("KERNEL_OK")
</pallas_src>

<mosaic_0001>
module attributes {stable_mosaic.version = 11 : i64} {
  func.func @_ddc_loss_kernel(%arg0: memref<32x16xf32, #tpu.memory_space<vmem>>, %arg1: memref<32x4xf32, #tpu.memory_space<vmem>>, %arg2: memref<1x128xf32, #tpu.memory_space<vmem>>) attributes {dimension_semantics = [], scalar_prefetch = 0 : i64, scratch_operands = 0 : i64, tpu.core_type = #tpu.core_type<tc>} {
    %c0 = arith.constant 0 : index
    %c0_0 = arith.constant 0 : index
    %0 = vector.load %arg0[%c0, %c0_0] : memref<32x16xf32, #tpu.memory_space<vmem>>, vector<32x16xf32>
    %c0_1 = arith.constant 0 : index
    %c0_2 = arith.constant 0 : index
    %1 = vector.load %arg1[%c0_1, %c0_2] : memref<32x4xf32, #tpu.memory_space<vmem>>, vector<32x4xf32>
    %cst = arith.constant dense<0.000000e+00> : vector<32x32xf32>
    %2 = tpu.matmul %0, %0, %cst {dimension_numbers = #tpu.dot_dimension_numbers<[1], [1], [0], [0], [0, 0, 1, 0], [], []>} : vector<32x16xf32>, vector<32x16xf32>, vector<32x32xf32> -> vector<32x32xf32>
    %3 = arith.mulf %0, %0 : vector<32x16xf32>
    %cst_3 = arith.constant dense<0.000000e+00> : vector<32xf32>
    %4 = vector.multi_reduction <add>, %3, %cst_3 [1] : vector<32x16xf32> to vector<32xf32>
    %5 = vector.shape_cast %4 : vector<32xf32> to vector<32x1xf32>
    %cst_4 = arith.constant 1.000000e+00 : f32
    %6 = vector.broadcast %cst_4 : f32 to vector<1x16xf32>
    %cst_5 = arith.constant dense<0.000000e+00> : vector<1x32xf32>
    %7 = tpu.matmul %6, %3, %cst_5 {dimension_numbers = #tpu.dot_dimension_numbers<[1], [1], [0], [0], [0, 0, 1, 0], [], []>} : vector<1x16xf32>, vector<32x16xf32>, vector<1x32xf32> -> vector<1x32xf32>
    %cst_6 = arith.constant 2.000000e+00 : f32
    %8 = vector.broadcast %cst_6 : f32 to vector<32x32xf32>
    %9 = arith.mulf %8, %2 : vector<32x32xf32>
    %10 = vector.broadcast %5 : vector<32x1xf32> to vector<32x32xf32>
    %11 = arith.subf %10, %9 : vector<32x32xf32>
    %12 = vector.broadcast %7 : vector<1x32xf32> to vector<32x32xf32>
    %13 = arith.addf %11, %12 : vector<32x32xf32>
    %cst_7 = arith.constant 0.000000e+00 : f32
    %14 = vector.broadcast %cst_7 : f32 to vector<32x32xf32>
    %15 = arith.maximumf %13, %14 : vector<32x32xf32>
    %16 = tpu.bitcast %15 : vector<32x32xf32> -> vector<32x32xi32>
    %c0_i32 = arith.constant 0 : i32
    %17 = vector.broadcast %c0_i32 : i32 to vector<1x1xi32>
    %c1073741824_i32 = arith.constant 1073741824 : i32
    %18 = vector.broadcast %c1073741824_i32 : i32 to vector<1x1xi32>
    %19 = arith.ori %17, %18 : vector<1x1xi32>
    %20 = vector.broadcast %19 : vector<1x1xi32> to vector<32x32xi32>
    %21 = arith.cmpi slt, %16, %20 : vector<32x32xi32>
    %22 = arith.extui %21 : vector<32x32xi1> to vector<32x32xi32>
    %23 = vector.shape_cast %22 : vector<32x32xi32> to vector<1x32x32xi32>
    %cst_8 = arith.constant dense<0> : vector<1xi32>
    %24 = vector.multi_reduction <add>, %23, %cst_8 [1, 2] : vector<1x32x32xi32> to vector<1xi32>
    %25 = vector.shape_cast %24 : vector<1xi32> to vector<1x1x1xi32>
    %26 = vector.extract %25[0, 0, 0] : i32 from vector<1x1x1xi32>
    %27 = vector.broadcast %26 : i32 to vector<1x1xi32>
    %c511_i32 = arith.constant 511 : i32
    %28 = vector.broadcast %c511_i32 : i32 to vector<1x1xi32>
    %29 = arith.cmpi sle, %27, %28 : vector<1x1xi32>
    %30 = arith.select %29, %19, %17 : vector<1x1xi1>, vector<1x1xi32>
    %c536870912_i32 = arith.constant 536870912 : i32
    %31 = vector.broadcast %c536870912_i32 : i32 to vector<1x1xi32>
    %32 = arith.ori %30, %31 : vector<1x1xi32>
    %33 = vector.broadcast %32 : vector<1x1xi32> to vector<32x32xi32>
    %34 = arith.cmpi slt, %16, %33 : vector<32x32xi32>
    %35 = arith.extui %34 : vector<32x32xi1> to vector<32x32xi32>
    %36 = vector.shape_cast %35 : vector<32x32xi32> to vector<1x32x32xi32>
    %cst_9 = arith.constant dense<0> : vector<1xi32>
    %37 = vector.multi_reduction <add>, %36, %cst_9 [1, 2] : vector<1x32x32xi32> to vector<1xi32>
    %38 = vector.shape_cast %37 : vector<1xi32> to vector<1x1x1xi32>
    %39 = vector.extract %38[0, 0, 0] : i32 from vector<1x1x1xi32>
    %40 = vector.broadcast %39 : i32 to vector<1x1xi32>
    %c511_i32_10 = arith.constant 511 : i32
    %41 = vector.broadcast %c511_i32_10 : i32 to vector<1x1xi32>
    %42 = arith.cmpi sle, %40, %41 : vector<1x1xi32>
    %43 = arith.select %42, %32, %30 : vector<1x1xi1>, vector<1x1xi32>
    %c268435456_i32 = arith.constant 268435456 : i32
    %44 = vector.broadcast %c268435456_i32 : i32 to vector<1x1xi32>
    %45 = arith.ori %43, %44 : vector<1x1xi32>
    %46 = vector.broadcast %45 : vector<1x1xi32> to vector<32x32xi32>
    %47 = arith.cmpi slt, %16, %46 : vector<32x32xi32>
    %48 = arith.extui %47 : vector<32x32xi1> to vector<32x32xi32>
    %49 = vector.shape_cast %48 : vector<32x32xi32> to vector<1x32x32xi32>
    %cst_11 = arith.constant dense<0> : vector<1xi32>
    %50 = vector.multi_reduction <add>, %49, %cst_11 [1, 2] : vector<1x32x32xi32> to vector<1xi32>
    %51 = vector.shape_cast %50 : vector<1xi32> to vector<1x1x1xi32>
    %52 = vector.extract %51[0, 0, 0] : i32 from vector<1x1x1xi32>
    %53 = vector.broadcast %52 : i32 to vector<1x1xi32>
    %c511_i32_12 = arith.constant 511 : i32
    %54 = vector.broadcast %c511_i32_12 : i32 to vector<1x1xi32>
    %55 = arith.cmpi sle, %53, %54 : vector<1x1xi32>
    %56 = arith.select %55, %45, %43 : vector<1x1xi1>, vector<1x1xi32>
    %c134217728_i32 = arith.constant 134217728 : i32
    %57 = vector.broadcast %c134217728_i32 : i32 to vector<1x1xi32>
    %58 = arith.ori %56, %57 : vector<1x1xi32>
    %59 = vector.broadcast %58 : vector<1x1xi32> to vector<32x32xi32>
    %60 = arith.cmpi slt, %16, %59 : vector<32x32xi32>
    %61 = arith.extui %60 : vector<32x32xi1> to vector<32x32xi32>
    %62 = vector.shape_cast %61 : vector<32x32xi32> to vector<1x32x32xi32>
    %cst_13 = arith.constant dense<0> : vector<1xi32>
    %63 = vector.multi_reduction <add>, %62, %cst_13 [1, 2] : vector<1x32x32xi32> to vector<1xi32>
    %64 = vector.shape_cast %63 : vector<1xi32> to vector<1x1x1xi32>
    %65 = vector.extract %64[0, 0, 0] : i32 from vector<1x1x1xi32>
    %66 = vector.broadcast %65 : i32 to vector<1x1xi32>
    %c511_i32_14 = arith.constant 511 : i32
    %67 = vector.broadcast %c511_i32_14 : i32 to vector<1x1xi32>
    %68 = arith.cmpi sle, %66, %67 : vector<1x1xi32>
    %69 = arith.select %68, %58, %56 : vector<1x1xi1>, vector<1x1xi32>
    %c67108864_i32 = arith.constant 67108864 : i32
    %70 = vector.broadcast %c67108864_i32 : i32 to vector<1x1xi32>
    %71 = arith.ori %69, %70 : vector<1x1xi32>
    %72 = vector.broadcast %71 : vector<1x1xi32> to vector<32x32xi32>
    %73 = arith.cmpi slt, %16, %72 : vector<32x32xi32>
    %74 = arith.extui %73 : vector<32x32xi1> to vector<32x32xi32>
    %75 = vector.shape_cast %74 : vector<32x32xi32> to vector<1x32x32xi32>
    %cst_15 = arith.constant dense<0> : vector<1xi32>
    %76 = vector.multi_reduction <add>, %75, %cst_15 [1, 2] : vector<1x32x32xi32> to vector<1xi32>
    %77 = vector.shape_cast %76 : vector<1xi32> to vector<1x1x1xi32>
    %78 = vector.extract %77[0, 0, 0] : i32 from vector<1x1x1xi32>
    %79 = vector.broadcast %78 : i32 to vector<1x1xi32>
    %c511_i32_16 = arith.constant 511 : i32
    %80 = vector.broadcast %c511_i32_16 : i32 to vector<1x1xi32>
    %81 = arith.cmpi sle, %79, %80 : vector<1x1xi32>
    %82 = arith.select %81, %71, %69 : vector<1x1xi1>, vector<1x1xi32>
    %c33554432_i32 = arith.constant 33554432 : i32
    %83 = vector.broadcast %c33554432_i32 : i32 to vector<1x1xi32>
    %84 = arith.ori %82, %83 : vector<1x1xi32>
    %85 = vector.broadcast %84 : vector<1x1xi32> to vector<32x32xi32>
    %86 = arith.cmpi slt, %16, %85 : vector<32x32xi32>
    %87 = arith.extui %86 : vector<32x32xi1> to vector<32x32xi32>
    %88 = vector.shape_cast %87 : vector<32x32xi32> to vector<1x32x32xi32>
    %cst_17 = arith.constant dense<0> : vector<1xi32>
    %89 = vector.multi_reduction <add>, %88, %cst_17 [1, 2] : vector<1x32x32xi32> to vector<1xi32>
    %90 = vector.shape_cast %89 : vector<1xi32> to vector<1x1x1xi32>
    %91 = vector.extract %90[0, 0, 0] : i32 from vector<1x1x1xi32>
    %92 = vector.broadcast %91 : i32 to vector<1x1xi32>
    %c511_i32_18 = arith.constant 511 : i32
    %93 = vector.broadcast %c511_i32_18 : i32 to vector<1x1xi32>
    %94 = arith.cmpi sle, %92, %93 : vector<1x1xi32>
    %95 = arith.select %94, %84, %82 : vector<1x1xi1>, vector<1x1xi32>
    %c16777216_i32 = arith.constant 16777216 : i32
    %96 = vector.broadcast %c16777216_i32 : i32 to vector<1x1xi32>
    %97 = arith.ori %95, %96 : vector<1x1xi32>
    %98 = vector.broadcast %97 : vector<1x1xi32> to vector<32x32xi32>
    %99 = arith.cmpi slt, %16, %98 : vector<32x32xi32>
    %100 = arith.extui %99 : vector<32x32xi1> to vector<32x32xi32>
    %101 = vector.shape_cast %100 : vector<32x32xi32> to vector<1x32x32xi32>
    %cst_19 = arith.constant dense<0> : vector<1xi32>
    %102 = vector.multi_reduction <add>, %101, %cst_19 [1, 2] : vector<1x32x32xi32> to vector<1xi32>
    %103 = vector.shape_cast %102 : vector<1xi32> to vector<1x1x1xi32>
    %104 = vector.extract %103[0, 0, 0] : i32 from vector<1x1x1xi32>
    %105 = vector.broadcast %104 : i32 to vector<1x1xi32>
    %c511_i32_20 = arith.constant 511 : i32
    %106 = vector.broadcast %c511_i32_20 : i32 to vector<1x1xi32>
    %107 = arith.cmpi sle, %105, %106 : vector<1x1xi32>
    %108 = arith.select %107, %97, %95 : vector<1x1xi1>, vector<1x1xi32>
    %c8388608_i32 = arith.constant 8388608 : i32
    %109 = vector.broadcast %c8388608_i32 : i32 to vector<1x1xi32>
    %110 = arith.ori %108, %109 : vector<1x1xi32>
    %111 = vector.broadcast %110 : vector<1x1xi32> to vector<32x32xi32>
    %112 = arith.cmpi slt, %16, %111 : vector<32x32xi32>
    %113 = arith.extui %112 : vector<32x32xi1> to vector<32x32xi32>
    %114 = vector.shape_cast %113 : vector<32x32xi32> to vector<1x32x32xi32>
    %cst_21 = arith.constant dense<0> : vector<1xi32>
    %115 = vector.multi_reduction <add>, %114, %cst_21 [1, 2] : vector<1x32x32xi32> to vector<1xi32>
    %116 = vector.shape_cast %115 : vector<1xi32> to vector<1x1x1xi32>
    %117 = vector.extract %116[0, 0, 0] : i32 from vector<1x1x1xi32>
    %118 = vector.broadcast %117 : i32 to vector<1x1xi32>
    %c511_i32_22 = arith.constant 511 : i32
    %119 = vector.broadcast %c511_i32_22 : i32 to vector<1x1xi32>
    %120 = arith.cmpi sle, %118, %119 : vector<1x1xi32>
    %121 = arith.select %120, %110, %108 : vector<1x1xi1>, vector<1x1xi32>
    %c4194304_i32 = arith.constant 4194304 : i32
    %122 = vector.broadcast %c4194304_i32 : i32 to vector<1x1xi32>
    %123 = arith.ori %121, %122 : vector<1x1xi32>
    %124 = vector.broadcast %123 : vector<1x1xi32> to vector<32x32xi32>
    %125 = arith.cmpi slt, %16, %124 : vector<32x32xi32>
    %126 = arith.extui %125 : vector<32x32xi1> to vector<32x32xi32>
    %127 = vector.shape_cast %126 : vector<32x32xi32> to vector<1x32x32xi32>
    %cst_23 = arith.constant dense<0> : vector<1xi32>
    %128 = vector.multi_reduction <add>, %127, %cst_23 [1, 2] : vector<1x32x32xi32> to vector<1xi32>
    %129 = vector.shape_cast %128 : vector<1xi32> to vector<1x1x1xi32>
    %130 = vector.extract %129[0, 0, 0] : i32 from vector<1x1x1xi32>
    %131 = vector.broadcast %130 : i32 to vector<1x1xi32>
    %c511_i32_24 = arith.constant 511 : i32
    %132 = vector.broadcast %c511_i32_24 : i32 to vector<1x1xi32>
    %133 = arith.cmpi sle, %131, %132 : vector<1x1xi32>
    %134 = arith.select %133, %123, %121 : vector<1x1xi1>, vector<1x1xi32>
    %c2097152_i32 = arith.constant 2097152 : i32
    %135 = vector.broadcast %c2097152_i32 : i32 to vector<1x1xi32>
    %136 = arith.ori %134, %135 : vector<1x1xi32>
    %137 = vector.broadcast %136 : vector<1x1xi32> to vector<32x32xi32>
    %138 = arith.cmpi slt, %16, %137 : vector<32x32xi32>
    %139 = arith.extui %138 : vector<32x32xi1> to vector<32x32xi32>
    %140 = vector.shape_cast %139 : vector<32x32xi32> to vector<1x32x32xi32>
    %cst_25 = arith.constant dense<0> : vector<1xi32>
    %141 = vector.multi_reduction <add>, %140, %cst_25 [1, 2] : vector<1x32x32xi32> to vector<1xi32>
    %142 = vector.shape_cast %141 : vector<1xi32> to vector<1x1x1xi32>
    %143 = vector.extract %142[0, 0, 0] : i32 from vector<1x1x1xi32>
    %144 = vector.broadcast %143 : i32 to vector<1x1xi32>
    %c511_i32_26 = arith.constant 511 : i32
    %145 = vector.broadcast %c511_i32_26 : i32 to vector<1x1xi32>
    %146 = arith.cmpi sle, %144, %145 : vector<1x1xi32>
    %147 = arith.select %146, %136, %134 : vector<1x1xi1>, vector<1x1xi32>
    %c1048576_i32 = arith.constant 1048576 : i32
    %148 = vector.broadcast %c1048576_i32 : i32 to vector<1x1xi32>
    %149 = arith.ori %147, %148 : vector<1x1xi32>
    %150 = vector.broadcast %149 : vector<1x1xi32> to vector<32x32xi32>
    %151 = arith.cmpi slt, %16, %150 : vector<32x32xi32>
    %152 = arith.extui %151 : vector<32x32xi1> to vector<32x32xi32>
    %153 = vector.shape_cast %152 : vector<32x32xi32> to vector<1x32x32xi32>
    %cst_27 = arith.constant dense<0> : vector<1xi32>
    %154 = vector.multi_reduction <add>, %153, %cst_27 [1, 2] : vector<1x32x32xi32> to vector<1xi32>
    %155 = vector.shape_cast %154 : vector<1xi32> to vector<1x1x1xi32>
    %156 = vector.extract %155[0, 0, 0] : i32 from vector<1x1x1xi32>
    %157 = vector.broadcast %156 : i32 to vector<1x1xi32>
    %c511_i32_28 = arith.constant 511 : i32
    %158 = vector.broadcast %c511_i32_28 : i32 to vector<1x1xi32>
    %159 = arith.cmpi sle, %157, %158 : vector<1x1xi32>
    %160 = arith.select %159, %149, %147 : vector<1x1xi1>, vector<1x1xi32>
    %c524288_i32 = arith.constant 524288 : i32
    %161 = vector.broadcast %c524288_i32 : i32 to vector<1x1xi32>
    %162 = arith.ori %160, %161 : vector<1x1xi32>
    %163 = vector.broadcast %162 : vector<1x1xi32> to vector<32x32xi32>
    %164 = arith.cmpi slt, %16, %163 : vector<32x32xi32>
    %165 = arith.extui %164 : vector<32x32xi1> to vector<32x32xi32>
    %166 = vector.shape_cast %165 : vector<32x32xi32> to vector<1x32x32xi32>
    %cst_29 = arith.constant dense<0> : vector<1xi32>
    %167 = vector.multi_reduction <add>, %166, %cst_29 [1, 2] : vector<1x32x32xi32> to vector<1xi32>
    %168 = vector.shape_cast %167 : vector<1xi32> to vector<1x1x1xi32>
    %169 = vector.extract %168[0, 0, 0] : i32 from vector<1x1x1xi32>
    %170 = vector.broadcast %169 : i32 to vector<1x1xi32>
    %c511_i32_30 = arith.constant 511 : i32
    %171 = vector.broadcast %c511_i32_30 : i32 to vector<1x1xi32>
    %172 = arith.cmpi sle, %170, %171 : vector<1x1xi32>
    %173 = arith.select %172, %162, %160 : vector<1x1xi1>, vector<1x1xi32>
    %c262144_i32 = arith.constant 262144 : i32
    %174 = vector.broadcast %c262144_i32 : i32 to vector<1x1xi32>
    %175 = arith.ori %173, %174 : vector<1x1xi32>
    %176 = vector.broadcast %175 : vector<1x1xi32> to vector<32x32xi32>
    %177 = arith.cmpi slt, %16, %176 : vector<32x32xi32>
    %178 = arith.extui %177 : vector<32x32xi1> to vector<32x32xi32>
    %179 = vector.shape_cast %178 : vector<32x32xi32> to vector<1x32x32xi32>
    %cst_31 = arith.constant dense<0> : vector<1xi32>
    %180 = vector.multi_reduction <add>, %179, %cst_31 [1, 2] : vector<1x32x32xi32> to vector<1xi32>
    %181 = vector.shape_cast %180 : vector<1xi32> to vector<1x1x1xi32>
    %182 = vector.extract %181[0, 0, 0] : i32 from vector<1x1x1xi32>
    %183 = vector.broadcast %182 : i32 to vector<1x1xi32>
    %c511_i32_32 = arith.constant 511 : i32
    %184 = vector.broadcast %c511_i32_32 : i32 to vector<1x1xi32>
    %185 = arith.cmpi sle, %183, %184 : vector<1x1xi32>
    %186 = arith.select %185, %175, %173 : vector<1x1xi1>, vector<1x1xi32>
    %c131072_i32 = arith.constant 131072 : i32
    %187 = vector.broadcast %c131072_i32 : i32 to vector<1x1xi32>
    %188 = arith.ori %186, %187 : vector<1x1xi32>
    %189 = vector.broadcast %188 : vector<1x1xi32> to vector<32x32xi32>
    %190 = arith.cmpi slt, %16, %189 : vector<32x32xi32>
    %191 = arith.extui %190 : vector<32x32xi1> to vector<32x32xi32>
    %192 = vector.shape_cast %191 : vector<32x32xi32> to vector<1x32x32xi32>
    %cst_33 = arith.constant dense<0> : vector<1xi32>
    %193 = vector.multi_reduction <add>, %192, %cst_33 [1, 2] : vector<1x32x32xi32> to vector<1xi32>
    %194 = vector.shape_cast %193 : vector<1xi32> to vector<1x1x1xi32>
    %195 = vector.extract %194[0, 0, 0] : i32 from vector<1x1x1xi32>
    %196 = vector.broadcast %195 : i32 to vector<1x1xi32>
    %c511_i32_34 = arith.constant 511 : i32
    %197 = vector.broadcast %c511_i32_34 : i32 to vector<1x1xi32>
    %198 = arith.cmpi sle, %196, %197 : vector<1x1xi32>
    %199 = arith.select %198, %188, %186 : vector<1x1xi1>, vector<1x1xi32>
    %c65536_i32 = arith.constant 65536 : i32
    %200 = vector.broadcast %c65536_i32 : i32 to vector<1x1xi32>
    %201 = arith.ori %199, %200 : vector<1x1xi32>
    %202 = vector.broadcast %201 : vector<1x1xi32> to vector<32x32xi32>
    %203 = arith.cmpi slt, %16, %202 : vector<32x32xi32>
    %204 = arith.extui %203 : vector<32x32xi1> to vector<32x32xi32>
    %205 = vector.shape_cast %204 : vector<32x32xi32> to vector<1x32x32xi32>
    %cst_35 = arith.constant dense<0> : vector<1xi32>
    %206 = vector.multi_reduction <add>, %205, %cst_35 [1, 2] : vector<1x32x32xi32> to vector<1xi32>
    %207 = vector.shape_cast %206 : vector<1xi32> to vector<1x1x1xi32>
    %208 = vector.extract %207[0, 0, 0] : i32 from vector<1x1x1xi32>
    %209 = vector.broadcast %208 : i32 to vector<1x1xi32>
    %c511_i32_36 = arith.constant 511 : i32
    %210 = vector.broadcast %c511_i32_36 : i32 to vector<1x1xi32>
    %211 = arith.cmpi sle, %209, %210 : vector<1x1xi32>
    %212 = arith.select %211, %201, %199 : vector<1x1xi1>, vector<1x1xi32>
    %c32768_i32 = arith.constant 32768 : i32
    %213 = vector.broadcast %c32768_i32 : i32 to vector<1x1xi32>
    %214 = arith.ori %212, %213 : vector<1x1xi32>
    %215 = vector.broadcast %214 : vector<1x1xi32> to vector<32x32xi32>
    %216 = arith.cmpi slt, %16, %215 : vector<32x32xi32>
    %217 = arith.extui %216 : vector<32x32xi1> to vector<32x32xi32>
    %218 = vector.shape_cast %217 : vector<32x32xi32> to vector<1x32x32xi32>
    %cst_37 = arith.constant dense<0> : vector<1xi32>
    %219 = vector.multi_reduction <add>, %218, %cst_37 [1, 2] : vector<1x32x32xi32> to vector<1xi32>
    %220 = vector.shape_cast %219 : vector<1xi32> to vector<1x1x1xi32>
    %221 = vector.extract %220[0, 0, 0] : i32 from vector<1x1x1xi32>
    %222 = vector.broadcast %221 : i32 to vector<1x1xi32>
    %c511_i32_38 = arith.constant 511 : i32
    %223 = vector.broadcast %c511_i32_38 : i32 to vector<1x1xi32>
    %224 = arith.cmpi sle, %222, %223 : vector<1x1xi32>
    %225 = arith.select %224, %214, %212 : vector<1x1xi1>, vector<1x1xi32>
    %c16384_i32 = arith.constant 16384 : i32
    %226 = vector.broadcast %c16384_i32 : i32 to vector<1x1xi32>
    %227 = arith.ori %225, %226 : vector<1x1xi32>
    %228 = vector.broadcast %227 : vector<1x1xi32> to vector<32x32xi32>
    %229 = arith.cmpi slt, %16, %228 : vector<32x32xi32>
    %230 = arith.extui %229 : vector<32x32xi1> to vector<32x32xi32>
    %231 = vector.shape_cast %230 : vector<32x32xi32> to vector<1x32x32xi32>
    %cst_39 = arith.constant dense<0> : vector<1xi32>
    %232 = vector.multi_reduction <add>, %231, %cst_39 [1, 2] : vector<1x32x32xi32> to vector<1xi32>
    %233 = vector.shape_cast %232 : vector<1xi32> to vector<1x1x1xi32>
    %234 = vector.extract %233[0, 0, 0] : i32 from vector<1x1x1xi32>
    %235 = vector.broadcast %234 : i32 to vector<1x1xi32>
    %c511_i32_40 = arith.constant 511 : i32
    %236 = vector.broadcast %c511_i32_40 : i32 to vector<1x1xi32>
    %237 = arith.cmpi sle, %235, %236 : vector<1x1xi32>
    %238 = arith.select %237, %227, %225 : vector<1x1xi1>, vector<1x1xi32>
    %c8192_i32 = arith.constant 8192 : i32
    %239 = vector.broadcast %c8192_i32 : i32 to vector<1x1xi32>
    %240 = arith.ori %238, %239 : vector<1x1xi32>
    %241 = vector.broadcast %240 : vector<1x1xi32> to vector<32x32xi32>
    %242 = arith.cmpi slt, %16, %241 : vector<32x32xi32>
    %243 = arith.extui %242 : vector<32x32xi1> to vector<32x32xi32>
    %244 = vector.shape_cast %243 : vector<32x32xi32> to vector<1x32x32xi32>
    %cst_41 = arith.constant dense<0> : vector<1xi32>
    %245 = vector.multi_reduction <add>, %244, %cst_41 [1, 2] : vector<1x32x32xi32> to vector<1xi32>
    %246 = vector.shape_cast %245 : vector<1xi32> to vector<1x1x1xi32>
    %247 = vector.extract %246[0, 0, 0] : i32 from vector<1x1x1xi32>
    %248 = vector.broadcast %247 : i32 to vector<1x1xi32>
    %c511_i32_42 = arith.constant 511 : i32
    %249 = vector.broadcast %c511_i32_42 : i32 to vector<1x1xi32>
    %250 = arith.cmpi sle, %248, %249 : vector<1x1xi32>
    %251 = arith.select %250, %240, %238 : vector<1x1xi1>, vector<1x1xi32>
    %c4096_i32 = arith.constant 4096 : i32
    %252 = vector.broadcast %c4096_i32 : i32 to vector<1x1xi32>
    %253 = arith.ori %251, %252 : vector<1x1xi32>
    %254 = vector.broadcast %253 : vector<1x1xi32> to vector<32x32xi32>
    %255 = arith.cmpi slt, %16, %254 : vector<32x32xi32>
    %256 = arith.extui %255 : vector<32x32xi1> to vector<32x32xi32>
    %257 = vector.shape_cast %256 : vector<32x32xi32> to vector<1x32x32xi32>
    %cst_43 = arith.constant dense<0> : vector<1xi32>
    %258 = vector.multi_reduction <add>, %257, %cst_43 [1, 2] : vector<1x32x32xi32> to vector<1xi32>
    %259 = vector.shape_cast %258 : vector<1xi32> to vector<1x1x1xi32>
    %260 = vector.extract %259[0, 0, 0] : i32 from vector<1x1x1xi32>
    %261 = vector.broadcast %260 : i32 to vector<1x1xi32>
    %c511_i32_44 = arith.constant 511 : i32
    %262 = vector.broadcast %c511_i32_44 : i32 to vector<1x1xi32>
    %263 = arith.cmpi sle, %261, %262 : vector<1x1xi32>
    %264 = arith.select %263, %253, %251 : vector<1x1xi1>, vector<1x1xi32>
    %c2048_i32 = arith.constant 2048 : i32
    %265 = vector.broadcast %c2048_i32 : i32 to vector<1x1xi32>
    %266 = arith.ori %264, %265 : vector<1x1xi32>
    %267 = vector.broadcast %266 : vector<1x1xi32> to vector<32x32xi32>
    %268 = arith.cmpi slt, %16, %267 : vector<32x32xi32>
    %269 = arith.extui %268 : vector<32x32xi1> to vector<32x32xi32>
    %270 = vector.shape_cast %269 : vector<32x32xi32> to vector<1x32x32xi32>
    %cst_45 = arith.constant dense<0> : vector<1xi32>
    %271 = vector.multi_reduction <add>, %270, %cst_45 [1, 2] : vector<1x32x32xi32> to vector<1xi32>
    %272 = vector.shape_cast %271 : vector<1xi32> to vector<1x1x1xi32>
    %273 = vector.extract %272[0, 0, 0] : i32 from vector<1x1x1xi32>
    %274 = vector.broadcast %273 : i32 to vector<1x1xi32>
    %c511_i32_46 = arith.constant 511 : i32
    %275 = vector.broadcast %c511_i32_46 : i32 to vector<1x1xi32>
    %276 = arith.cmpi sle, %274, %275 : vector<1x1xi32>
    %277 = arith.select %276, %266, %264 : vector<1x1xi1>, vector<1x1xi32>
    %c1024_i32 = arith.constant 1024 : i32
    %278 = vector.broadcast %c1024_i32 : i32 to vector<1x1xi32>
    %279 = arith.ori %277, %278 : vector<1x1xi32>
    %280 = vector.broadcast %279 : vector<1x1xi32> to vector<32x32xi32>
    %281 = arith.cmpi slt, %16, %280 : vector<32x32xi32>
    %282 = arith.extui %281 : vector<32x32xi1> to vector<32x32xi32>
    %283 = vector.shape_cast %282 : vector<32x32xi32> to vector<1x32x32xi32>
    %cst_47 = arith.constant dense<0> : vector<1xi32>
    %284 = vector.multi_reduction <add>, %283, %cst_47 [1, 2] : vector<1x32x32xi32> to vector<1xi32>
    %285 = vector.shape_cast %284 : vector<1xi32> to vector<1x1x1xi32>
    %286 = vector.extract %285[0, 0, 0] : i32 from vector<1x1x1xi32>
    %287 = vector.broadcast %286 : i32 to vector<1x1xi32>
    %c511_i32_48 = arith.constant 511 : i32
    %288 = vector.broadcast %c511_i32_48 : i32 to vector<1x1xi32>
    %289 = arith.cmpi sle, %287, %288 : vector<1x1xi32>
    %290 = arith.select %289, %279, %277 : vector<1x1xi1>, vector<1x1xi32>
    %c512_i32 = arith.constant 512 : i32
    %291 = vector.broadcast %c512_i32 : i32 to vector<1x1xi32>
    %292 = arith.ori %290, %291 : vector<1x1xi32>
    %293 = vector.broadcast %292 : vector<1x1xi32> to vector<32x32xi32>
    %294 = arith.cmpi slt, %16, %293 : vector<32x32xi32>
    %295 = arith.extui %294 : vector<32x32xi1> to vector<32x32xi32>
    %296 = vector.shape_cast %295 : vector<32x32xi32> to vector<1x32x32xi32>
    %cst_49 = arith.constant dense<0> : vector<1xi32>
    %297 = vector.multi_reduction <add>, %296, %cst_49 [1, 2] : vector<1x32x32xi32> to vector<1xi32>
    %298 = vector.shape_cast %297 : vector<1xi32> to vector<1x1x1xi32>
    %299 = vector.extract %298[0, 0, 0] : i32 from vector<1x1x1xi32>
    %300 = vector.broadcast %299 : i32 to vector<1x1xi32>
    %c511_i32_50 = arith.constant 511 : i32
    %301 = vector.broadcast %c511_i32_50 : i32 to vector<1x1xi32>
    %302 = arith.cmpi sle, %300, %301 : vector<1x1xi32>
    %303 = arith.select %302, %292, %290 : vector<1x1xi1>, vector<1x1xi32>
    %c256_i32 = arith.constant 256 : i32
    %304 = vector.broadcast %c256_i32 : i32 to vector<1x1xi32>
    %305 = arith.ori %303, %304 : vector<1x1xi32>
    %306 = vector.broadcast %305 : vector<1x1xi32> to vector<32x32xi32>
    %307 = arith.cmpi slt, %16, %306 : vector<32x32xi32>
    %308 = arith.extui %307 : vector<32x32xi1> to vector<32x32xi32>
    %309 = vector.shape_cast %308 : vector<32x32xi32> to vector<1x32x32xi32>
    %cst_51 = arith.constant dense<0> : vector<1xi32>
    %310 = vector.multi_reduction <add>, %309, %cst_51 [1, 2] : vector<1x32x32xi32> to vector<1xi32>
    %311 = vector.shape_cast %310 : vector<1xi32> to vector<1x1x1xi32>
    %312 = vector.extract %311[0, 0, 0] : i32 from vector<1x1x1xi32>
    %313 = vector.broadcast %312 : i32 to vector<1x1xi32>
    %c511_i32_52 = arith.constant 511 : i32
    %314 = vector.broadcast %c511_i32_52 : i32 to vector<1x1xi32>
    %315 = arith.cmpi sle, %313, %314 : vector<1x1xi32>
    %316 = arith.select %315, %305, %303 : vector<1x1xi1>, vector<1x1xi32>
    %c128_i32 = arith.constant 128 : i32
    %317 = vector.broadcast %c128_i32 : i32 to vector<1x1xi32>
    %318 = arith.ori %316, %317 : vector<1x1xi32>
    %319 = vector.broadcast %318 : vector<1x1xi32> to vector<32x32xi32>
    %320 = arith.cmpi slt, %16, %319 : vector<32x32xi32>
    %321 = arith.extui %320 : vector<32x32xi1> to vector<32x32xi32>
    %322 = vector.shape_cast %321 : vector<32x32xi32> to vector<1x32x32xi32>
    %cst_53 = arith.constant dense<0> : vector<1xi32>
    %323 = vector.multi_reduction <add>, %322, %cst_53 [1, 2] : vector<1x32x32xi32> to vector<1xi32>
    %324 = vector.shape_cast %323 : vector<1xi32> to vector<1x1x1xi32>
    %325 = vector.extract %324[0, 0, 0] : i32 from vector<1x1x1xi32>
    %326 = vector.broadcast %325 : i32 to vector<1x1xi32>
    %c511_i32_54 = arith.constant 511 : i32
    %327 = vector.broadcast %c511_i32_54 : i32 to vector<1x1xi32>
    %328 = arith.cmpi sle, %326, %327 : vector<1x1xi32>
    %329 = arith.select %328, %318, %316 : vector<1x1xi1>, vector<1x1xi32>
    %c64_i32 = arith.constant 64 : i32
    %330 = vector.broadcast %c64_i32 : i32 to vector<1x1xi32>
    %331 = arith.ori %329, %330 : vector<1x1xi32>
    %332 = vector.broadcast %331 : vector<1x1xi32> to vector<32x32xi32>
    %333 = arith.cmpi slt, %16, %332 : vector<32x32xi32>
    %334 = arith.extui %333 : vector<32x32xi1> to vector<32x32xi32>
    %335 = vector.shape_cast %334 : vector<32x32xi32> to vector<1x32x32xi32>
    %cst_55 = arith.constant dense<0> : vector<1xi32>
    %336 = vector.multi_reduction <add>, %335, %cst_55 [1, 2] : vector<1x32x32xi32> to vector<1xi32>
    %337 = vector.shape_cast %336 : vector<1xi32> to vector<1x1x1xi32>
    %338 = vector.extract %337[0, 0, 0] : i32 from vector<1x1x1xi32>
    %339 = vector.broadcast %338 : i32 to vector<1x1xi32>
    %c511_i32_56 = arith.constant 511 : i32
    %340 = vector.broadcast %c511_i32_56 : i32 to vector<1x1xi32>
    %341 = arith.cmpi sle, %339, %340 : vector<1x1xi32>
    %342 = arith.select %341, %331, %329 : vector<1x1xi1>, vector<1x1xi32>
    %c32_i32 = arith.constant 32 : i32
    %343 = vector.broadcast %c32_i32 : i32 to vector<1x1xi32>
    %344 = arith.ori %342, %343 : vector<1x1xi32>
    %345 = vector.broadcast %344 : vector<1x1xi32> to vector<32x32xi32>
    %346 = arith.cmpi slt, %16, %345 : vector<32x32xi32>
    %347 = arith.extui %346 : vector<32x32xi1> to vector<32x32xi32>
    %348 = vector.shape_cast %347 : vector<32x32xi32> to vector<1x32x32xi32>
    %cst_57 = arith.constant dense<0> : vector<1xi32>
    %349 = vector.multi_reduction <add>, %348, %cst_57 [1, 2] : vector<1x32x32xi32> to vector<1xi32>
    %350 = vector.shape_cast %349 : vector<1xi32> to vector<1x1x1xi32>
    %351 = vector.extract %350[0, 0, 0] : i32 from vector<1x1x1xi32>
    %352 = vector.broadcast %351 : i32 to vector<1x1xi32>
    %c511_i32_58 = arith.constant 511 : i32
    %353 = vector.broadcast %c511_i32_58 : i32 to vector<1x1xi32>
    %354 = arith.cmpi sle, %352, %353 : vector<1x1xi32>
    %355 = arith.select %354, %344, %342 : vector<1x1xi1>, vector<1x1xi32>
    %c16_i32 = arith.constant 16 : i32
    %356 = vector.broadcast %c16_i32 : i32 to vector<1x1xi32>
    %357 = arith.ori %355, %356 : vector<1x1xi32>
    %358 = vector.broadcast %357 : vector<1x1xi32> to vector<32x32xi32>
    %359 = arith.cmpi slt, %16, %358 : vector<32x32xi32>
    %360 = arith.extui %359 : vector<32x32xi1> to vector<32x32xi32>
    %361 = vector.shape_cast %360 : vector<32x32xi32> to vector<1x32x32xi32>
    %cst_59 = arith.constant dense<0> : vector<1xi32>
    %362 = vector.multi_reduction <add>, %361, %cst_59 [1, 2] : vector<1x32x32xi32> to vector<1xi32>
    %363 = vector.shape_cast %362 : vector<1xi32> to vector<1x1x1xi32>
    %364 = vector.extract %363[0, 0, 0] : i32 from vector<1x1x1xi32>
    %365 = vector.broadcast %364 : i32 to vector<1x1xi32>
    %c511_i32_60 = arith.constant 511 : i32
    %366 = vector.broadcast %c511_i32_60 : i32 to vector<1x1xi32>
    %367 = arith.cmpi sle, %365, %366 : vector<1x1xi32>
    %368 = arith.select %367, %357, %355 : vector<1x1xi1>, vector<1x1xi32>
    %c8_i32 = arith.constant 8 : i32
    %369 = vector.broadcast %c8_i32 : i32 to vector<1x1xi32>
    %370 = arith.ori %368, %369 : vector<1x1xi32>
    %371 = vector.broadcast %370 : vector<1x1xi32> to vector<32x32xi32>
    %372 = arith.cmpi slt, %16, %371 : vector<32x32xi32>
    %373 = arith.extui %372 : vector<32x32xi1> to vector<32x32xi32>
    %374 = vector.shape_cast %373 : vector<32x32xi32> to vector<1x32x32xi32>
    %cst_61 = arith.constant dense<0> : vector<1xi32>
    %375 = vector.multi_reduction <add>, %374, %cst_61 [1, 2] : vector<1x32x32xi32> to vector<1xi32>
    %376 = vector.shape_cast %375 : vector<1xi32> to vector<1x1x1xi32>
    %377 = vector.extract %376[0, 0, 0] : i32 from vector<1x1x1xi32>
    %378 = vector.broadcast %377 : i32 to vector<1x1xi32>
    %c511_i32_62 = arith.constant 511 : i32
    %379 = vector.broadcast %c511_i32_62 : i32 to vector<1x1xi32>
    %380 = arith.cmpi sle, %378, %379 : vector<1x1xi32>
    %381 = arith.select %380, %370, %368 : vector<1x1xi1>, vector<1x1xi32>
    %c4_i32 = arith.constant 4 : i32
    %382 = vector.broadcast %c4_i32 : i32 to vector<1x1xi32>
    %383 = arith.ori %381, %382 : vector<1x1xi32>
    %384 = vector.broadcast %383 : vector<1x1xi32> to vector<32x32xi32>
    %385 = arith.cmpi slt, %16, %384 : vector<32x32xi32>
    %386 = arith.extui %385 : vector<32x32xi1> to vector<32x32xi32>
    %387 = vector.shape_cast %386 : vector<32x32xi32> to vector<1x32x32xi32>
    %cst_63 = arith.constant dense<0> : vector<1xi32>
    %388 = vector.multi_reduction <add>, %387, %cst_63 [1, 2] : vector<1x32x32xi32> to vector<1xi32>
    %389 = vector.shape_cast %388 : vector<1xi32> to vector<1x1x1xi32>
    %390 = vector.extract %389[0, 0, 0] : i32 from vector<1x1x1xi32>
    %391 = vector.broadcast %390 : i32 to vector<1x1xi32>
    %c511_i32_64 = arith.constant 511 : i32
    %392 = vector.broadcast %c511_i32_64 : i32 to vector<1x1xi32>
    %393 = arith.cmpi sle, %391, %392 : vector<1x1xi32>
    %394 = arith.select %393, %383, %381 : vector<1x1xi1>, vector<1x1xi32>
    %c2_i32 = arith.constant 2 : i32
    %395 = vector.broadcast %c2_i32 : i32 to vector<1x1xi32>
    %396 = arith.ori %394, %395 : vector<1x1xi32>
    %397 = vector.broadcast %396 : vector<1x1xi32> to vector<32x32xi32>
    %398 = arith.cmpi slt, %16, %397 : vector<32x32xi32>
    %399 = arith.extui %398 : vector<32x32xi1> to vector<32x32xi32>
    %400 = vector.shape_cast %399 : vector<32x32xi32> to vector<1x32x32xi32>
    %cst_65 = arith.constant dense<0> : vector<1xi32>
    %401 = vector.multi_reduction <add>, %400, %cst_65 [1, 2] : vector<1x32x32xi32> to vector<1xi32>
    %402 = vector.shape_cast %401 : vector<1xi32> to vector<1x1x1xi32>
    %403 = vector.extract %402[0, 0, 0] : i32 from vector<1x1x1xi32>
    %404 = vector.broadcast %403 : i32 to vector<1x1xi32>
    %c511_i32_66 = arith.constant 511 : i32
    %405 = vector.broadcast %c511_i32_66 : i32 to vector<1x1xi32>
    %406 = arith.cmpi sle, %404, %405 : vector<1x1xi32>
    %407 = arith.select %406, %396, %394 : vector<1x1xi1>, vector<1x1xi32>
    %c1_i32 = arith.constant 1 : i32
    %408 = vector.broadcast %c1_i32 : i32 to vector<1x1xi32>
    %409 = arith.ori %407, %408 : vector<1x1xi32>
    %410 = vector.broadcast %409 : vector<1x1xi32> to vector<32x32xi32>
    %411 = arith.cmpi slt, %16, %410 : vector<32x32xi32>
    %412 = arith.extui %411 : vector<32x32xi1> to vector<32x32xi32>
    %413 = vector.shape_cast %412 : vector<32x32xi32> to vector<1x32x32xi32>
    %cst_67 = arith.constant dense<0> : vector<1xi32>
    %414 = vector.multi_reduction <add>, %413, %cst_67 [1, 2] : vector<1x32x32xi32> to vector<1xi32>
    %415 = vector.shape_cast %414 : vector<1xi32> to vector<1x1x1xi32>
    %416 = vector.extract %415[0, 0, 0] : i32 from vector<1x1x1xi32>
    %417 = vector.broadcast %416 : i32 to vector<1x1xi32>
    %c511_i32_68 = arith.constant 511 : i32
    %418 = vector.broadcast %c511_i32_68 : i32 to vector<1x1xi32>
    %419 = arith.cmpi sle, %417, %418 : vector<1x1xi32>
    %420 = arith.select %419, %409, %407 : vector<1x1xi1>, vector<1x1xi32>
    %421 = tpu.bitcast %420 : vector<1x1xi32> -> vector<1x1xf32>
    %cst_69 = arith.constant 1.500000e-01 : f32
    %422 = vector.broadcast %cst_69 : f32 to vector<1x1xf32>
    %423 = arith.mulf %422, %421 : vector<1x1xf32>
    %cst_70 = arith.constant 9.99999971E-10 : f32
    %424 = vector.broadcast %cst_70 : f32 to vector<1x1xf32>
    %425 = arith.maximumf %423, %424 : vector<1x1xf32>
    %cst_71 = arith.constant -5.000000e-01 : f32
    %426 = vector.broadcast %cst_71 : f32 to vector<1x1xf32>
    %427 = arith.divf %426, %425 : vector<1x1xf32>
    %428 = vector.broadcast %427 : vector<1x1xf32> to vector<32x32xf32>
    %429 = arith.mulf %15, %428 : vector<32x32xf32>
    %430 = math.exp %429 : vector<32x32xf32>
    %431 = arith.mulf %1, %1 : vector<32x4xf32>
    %cst_72 = arith.constant dense<0.000000e+00> : vector<32xf32>
    %432 = vector.multi_reduction <add>, %431, %cst_72 [1] : vector<32x4xf32> to vector<32xf32>
    %433 = vector.shape_cast %432 : vector<32xf32> to vector<32x1xf32>
    %cst_73 = arith.constant 2.000000e+00 : f32
    %434 = vector.broadcast %cst_73 : f32 to vector<32x4xf32>
    %435 = arith.mulf %434, %1 : vector<32x4xf32>
    %436 = vector.broadcast %433 : vector<32x1xf32> to vector<32x4xf32>
    %437 = arith.subf %436, %435 : vector<32x4xf32>
    %cst_74 = arith.constant 1.000000e+00 : f32
    %438 = vector.broadcast %cst_74 : f32 to vector<32x4xf32>
    %439 = arith.addf %437, %438 : vector<32x4xf32>
    %cst_75 = arith.constant 0.000000e+00 : f32
    %440 = vector.broadcast %cst_75 : f32 to vector<32x4xf32>
    %441 = arith.subf %440, %439 : vector<32x4xf32>
    %442 = math.exp %441 : vector<32x4xf32>
    %443 = tpu.concatenate %1, %442 in 1 : vector<32x4xf32>, vector<32x4xf32> -> vector<32x8xf32>
    %cst_76 = arith.constant dense<0.000000e+00> : vector<32x8xf32>
    %444 = tpu.matmul %430, %443, %cst_76 {dimension_numbers = #tpu.dot_dimension_numbers<[1], [0], [0], [1], [0, 0, 1, 1], [], []>} : vector<32x32xf32>, vector<32x8xf32>, vector<32x8xf32> -> vector<32x8xf32>
    %cst_77 = arith.constant dense<0.000000e+00> : vector<8x8xf32>
    %445 = tpu.matmul %443, %444, %cst_77 {dimension_numbers = #tpu.dot_dimension_numbers<[0], [0], [1], [1], [0, 1, 1, 1], [], []>} : vector<32x8xf32>, vector<32x8xf32>, vector<8x8xf32> -> vector<8x8xf32>
    %446 = arith.mulf %443, %444 : vector<32x8xf32>
    %cst_78 = arith.constant dense<0.000000e+00> : vector<8xf32>
    %447 = vector.multi_reduction <add>, %446, %cst_78 [0] : vector<32x8xf32> to vector<8xf32>
    %448 = vector.shape_cast %447 : vector<8xf32> to vector<1x8xf32>
    %449 = tpu.iota {dimensions = array<i32: 0>} : vector<8x8xi32>
    %450 = tpu.iota {dimensions = array<i32: 1>} : vector<8x8xi32>
    %451 = arith.cmpi eq, %449, %450 : vector<8x8xi32>
    %452 = arith.extui %451 : vector<8x8xi1> to vector<8x8xi32>
    %453 = arith.sitofp %452 : vector<8x8xi32> to vector<8x8xf32>
    %454 = arith.mulf %445, %453 : vector<8x8xf32>
    %cst_79 = arith.constant dense<0.000000e+00> : vector<8xf32>
    %455 = vector.multi_reduction <add>, %454, %cst_79 [1] : vector<8x8xf32> to vector<8xf32>
    %456 = vector.shape_cast %455 : vector<8xf32> to vector<8x1xf32>
    %457 = vector.extract_strided_slice %445 {offsets = [0, 0], sizes = [4, 4], strides = [1, 1]} : vector<8x8xf32> to vector<4x4xf32>
    %458 = vector.extract_strided_slice %456 {offsets = [0, 0], sizes = [4, 1], strides = [1, 1]} : vector<8x1xf32> to vector<4x1xf32>
    %459 = vector.extract_strided_slice %448 {offsets = [0, 0], sizes = [1, 4], strides = [1, 1]} : vector<1x8xf32> to vector<1x4xf32>
    %460 = vector.broadcast %458 : vector<4x1xf32> to vector<4x4xf32>
    %461 = vector.broadcast %459 : vector<1x4xf32> to vector<4x4xf32>
    %462 = arith.mulf %460, %461 : vector<4x4xf32>
    %cst_80 = arith.constant 9.99999971E-10 : f32
    %463 = vector.broadcast %cst_80 : f32 to vector<4x4xf32>
    %464 = arith.cmpf olt, %457, %463 : vector<4x4xf32>
    %cst_81 = arith.constant 9.99999971E-10 : f32
    %465 = vector.broadcast %cst_81 : f32 to vector<4x4xf32>
    %466 = arith.select %464, %465, %457 : vector<4x4xi1>, vector<4x4xf32>
    %cst_82 = arith.constant 1.000000e-18 : f32
    %467 = vector.broadcast %cst_82 : f32 to vector<4x4xf32>
    %468 = arith.cmpf olt, %462, %467 : vector<4x4xf32>
    %cst_83 = arith.constant 1.000000e-18 : f32
    %469 = vector.broadcast %cst_83 : f32 to vector<4x4xf32>
    %470 = arith.select %468, %469, %462 : vector<4x4xi1>, vector<4x4xf32>
    %471 = math.rsqrt %470 : vector<4x4xf32>
    %472 = arith.mulf %466, %471 : vector<4x4xf32>
    %cst_84 = arith.constant 9.99999971E-10 : f32
    %473 = vector.broadcast %cst_84 : f32 to vector<1x4xf32>
    %474 = arith.cmpf olt, %459, %473 : vector<1x4xf32>
    %cst_85 = arith.constant 9.99999971E-10 : f32
    %475 = vector.broadcast %cst_85 : f32 to vector<1x4xf32>
    %476 = arith.select %474, %475, %459 : vector<1x4xi1>, vector<1x4xf32>
    %477 = arith.mulf %459, %459 : vector<1x4xf32>
    %cst_86 = arith.constant 1.000000e-18 : f32
    %478 = vector.broadcast %cst_86 : f32 to vector<1x4xf32>
    %479 = arith.cmpf olt, %477, %478 : vector<1x4xf32>
    %cst_87 = arith.constant 1.000000e-18 : f32
    %480 = vector.broadcast %cst_87 : f32 to vector<1x4xf32>
    %481 = arith.select %479, %480, %477 : vector<1x4xi1>, vector<1x4xf32>
    %482 = math.rsqrt %481 : vector<1x4xf32>
    %483 = arith.mulf %476, %482 : vector<1x4xf32>
    %484 = vector.shape_cast %472 : vector<4x4xf32> to vector<1x4x4xf32>
    %cst_88 = arith.constant dense<0.000000e+00> : vector<1xf32>
    %485 = vector.multi_reduction <add>, %484, %cst_88 [1, 2] : vector<1x4x4xf32> to vector<1xf32>
    %486 = vector.shape_cast %485 : vector<1xf32> to vector<1x1x1xf32>
    %487 = vector.extract %486[0, 0, 0] : f32 from vector<1x1x1xf32>
    %488 = vector.broadcast %487 : f32 to vector<1x1xf32>
    %489 = vector.shape_cast %483 : vector<1x4xf32> to vector<1x1x4xf32>
    %cst_89 = arith.constant dense<0.000000e+00> : vector<1xf32>
    %490 = vector.multi_reduction <add>, %489, %cst_89 [1, 2] : vector<1x1x4xf32> to vector<1xf32>
    %491 = vector.shape_cast %490 : vector<1xf32> to vector<1x1x1xf32>
    %492 = vector.extract %491[0, 0, 0] : f32 from vector<1x1x1xf32>
    %493 = vector.broadcast %492 : f32 to vector<1x1xf32>
    %494 = arith.subf %488, %493 : vector<1x1xf32>
    %cst_90 = arith.constant 1.200000e+01 : f32
    %495 = vector.broadcast %cst_90 : f32 to vector<1x1xf32>
    %496 = arith.divf %494, %495 : vector<1x1xf32>
    %497 = vector.extract_strided_slice %445 {offsets = [4, 4], sizes = [4, 4], strides = [1, 1]} : vector<8x8xf32> to vector<4x4xf32>
    %498 = vector.extract_strided_slice %456 {offsets = [4, 0], sizes = [4, 1], strides = [1, 1]} : vector<8x1xf32> to vector<4x1xf32>
    %499 = vector.extract_strided_slice %448 {offsets = [0, 4], sizes = [1, 4], strides = [1, 1]} : vector<1x8xf32> to vector<1x4xf32>
    %500 = vector.broadcast %498 : vector<4x1xf32> to vector<4x4xf32>
    %501 = vector.broadcast %499 : vector<1x4xf32> to vector<4x4xf32>
    %502 = arith.mulf %500, %501 : vector<4x4xf32>
    %cst_91 = arith.constant 9.99999971E-10 : f32
    %503 = vector.broadcast %cst_91 : f32 to vector<4x4xf32>
    %504 = arith.cmpf olt, %497, %503 : vector<4x4xf32>
    %cst_92 = arith.constant 9.99999971E-10 : f32
    %505 = vector.broadcast %cst_92 : f32 to vector<4x4xf32>
    %506 = arith.select %504, %505, %497 : vector<4x4xi1>, vector<4x4xf32>
    %cst_93 = arith.constant 1.000000e-18 : f32
    %507 = vector.broadcast %cst_93 : f32 to vector<4x4xf32>
    %508 = arith.cmpf olt, %502, %507 : vector<4x4xf32>
    %cst_94 = arith.constant 1.000000e-18 : f32
    %509 = vector.broadcast %cst_94 : f32 to vector<4x4xf32>
    %510 = arith.select %508, %509, %502 : vector<4x4xi1>, vector<4x4xf32>
    %511 = math.rsqrt %510 : vector<4x4xf32>
    %512 = arith.mulf %506, %511 : vector<4x4xf32>
    %cst_95 = arith.constant 9.99999971E-10 : f32
    %513 = vector.broadcast %cst_95 : f32 to vector<1x4xf32>
    %514 = arith.cmpf olt, %499, %513 : vector<1x4xf32>
    %cst_96 = arith.constant 9.99999971E-10 : f32
    %515 = vector.broadcast %cst_96 : f32 to vector<1x4xf32>
    %516 = arith.select %514, %515, %499 : vector<1x4xi1>, vector<1x4xf32>
    %517 = arith.mulf %499, %499 : vector<1x4xf32>
    %cst_97 = arith.constant 1.000000e-18 : f32
    %518 = vector.broadcast %cst_97 : f32 to vector<1x4xf32>
    %519 = arith.cmpf olt, %517, %518 : vector<1x4xf32>
    %cst_98 = arith.constant 1.000000e-18 : f32
    %520 = vector.broadcast %cst_98 : f32 to vector<1x4xf32>
    %521 = arith.select %519, %520, %517 : vector<1x4xi1>, vector<1x4xf32>
    %522 = math.rsqrt %521 : vector<1x4xf32>
    %523 = arith.mulf %516, %522 : vector<1x4xf32>
    %524 = vector.shape_cast %512 : vector<4x4xf32> to vector<1x4x4xf32>
    %cst_99 = arith.constant dense<0.000000e+00> : vector<1xf32>
    %525 = vector.multi_reduction <add>, %524, %cst_99 [1, 2] : vector<1x4x4xf32> to vector<1xf32>
    %526 = vector.shape_cast %525 : vector<1xf32> to vector<1x1x1xf32>
    %527 = vector.extract %526[0, 0, 0] : f32 from vector<1x1x1xf32>
    %528 = vector.broadcast %527 : f32 to vector<1x1xf32>
    %529 = vector.shape_cast %523 : vector<1x4xf32> to vector<1x1x4xf32>
    %cst_100 = arith.constant dense<0.000000e+00> : vector<1xf32>
    %530 = vector.multi_reduction <add>, %529, %cst_100 [1, 2] : vector<1x1x4xf32> to vector<1xf32>
    %531 = vector.shape_cast %530 : vector<1xf32> to vector<1x1x1xf32>
    %532 = vector.extract %531[0, 0, 0] : f32 from vector<1x1x1xf32>
    %533 = vector.broadcast %532 : f32 to vector<1x1xf32>
    %534 = arith.subf %528, %533 : vector<1x1xf32>
    %cst_101 = arith.constant 1.200000e+01 : f32
    %535 = vector.broadcast %cst_101 : f32 to vector<1x1xf32>
    %536 = arith.divf %534, %535 : vector<1x1xf32>
    %cst_102 = arith.constant dense<0.000000e+00> : vector<4xf32>
    %537 = vector.multi_reduction <add>, %1, %cst_102 [0] : vector<32x4xf32> to vector<4xf32>
    %538 = vector.shape_cast %537 : vector<4xf32> to vector<1x4xf32>
    %539 = arith.mulf %538, %538 : vector<1x4xf32>
    %540 = vector.shape_cast %539 : vector<1x4xf32> to vector<1x1x4xf32>
    %cst_103 = arith.constant dense<0.000000e+00> : vector<1xf32>
    %541 = vector.multi_reduction <add>, %540, %cst_103 [1, 2] : vector<1x1x4xf32> to vector<1xf32>
    %542 = vector.shape_cast %541 : vector<1xf32> to vector<1x1x1xf32>
    %543 = vector.extract %542[0, 0, 0] : f32 from vector<1x1x1xf32>
    %544 = vector.broadcast %543 : f32 to vector<1x1xf32>
    %545 = vector.shape_cast %431 : vector<32x4xf32> to vector<1x32x4xf32>
    %cst_104 = arith.constant dense<0.000000e+00> : vector<1xf32>
    %546 = vector.multi_reduction <add>, %545, %cst_104 [1, 2] : vector<1x32x4xf32> to vector<1xf32>
    %547 = vector.shape_cast %546 : vector<1xf32> to vector<1x1x1xf32>
    %548 = vector.extract %547[0, 0, 0] : f32 from vector<1x1x1xf32>
    %549 = vector.broadcast %548 : f32 to vector<1x1xf32>
    %550 = arith.subf %544, %549 : vector<1x1xf32>
    %cst_105 = arith.constant 9.920000e+02 : f32
    %551 = vector.broadcast %cst_105 : f32 to vector<1x1xf32>
    %552 = arith.divf %550, %551 : vector<1x1xf32>
    %553 = tpu.iota {dimensions = array<i32: 1>} : vector<1x128xi32>
    %c0_i32_106 = arith.constant 0 : i32
    %554 = vector.broadcast %c0_i32_106 : i32 to vector<1x128xi32>
    %555 = arith.cmpi eq, %553, %554 : vector<1x128xi32>
    %556 = arith.extui %555 : vector<1x128xi1> to vector<1x128xi32>
    %557 = arith.sitofp %556 : vector<1x128xi32> to vector<1x128xf32>
    %558 = vector.broadcast %496 : vector<1x1xf32> to vector<1x128xf32>
    %559 = arith.mulf %558, %557 : vector<1x128xf32>
    %c1_i32_107 = arith.constant 1 : i32
    %560 = vector.broadcast %c1_i32_107 : i32 to vector<1x128xi32>
    %561 = arith.cmpi eq, %553, %560 : vector<1x128xi32>
    %562 = arith.extui %561 : vector<1x128xi1> to vector<1x128xi32>
    %563 = arith.sitofp %562 : vector<1x128xi32> to vector<1x128xf32>
    %564 = vector.broadcast %552 : vector<1x1xf32> to vector<1x128xf32>
    %565 = arith.mulf %564, %563 : vector<1x128xf32>
    %566 = arith.addf %559, %565 : vector<1x128xf32>
    %c2_i32_108 = arith.constant 2 : i32
    %567 = vector.broadcast %c2_i32_108 : i32 to vector<1x128xi32>
    %568 = arith.cmpi eq, %553, %567 : vector<1x128xi32>
    %569 = arith.extui %568 : vector<1x128xi1> to vector<1x128xi32>
    %570 = arith.sitofp %569 : vector<1x128xi32> to vector<1x128xf32>
    %571 = vector.broadcast %536 : vector<1x1xf32> to vector<1x128xf32>
    %572 = arith.mulf %571, %570 : vector<1x128xf32>
    %573 = arith.addf %566, %572 : vector<1x128xf32>
    %c0_109 = arith.constant 0 : index
    %c0_110 = arith.constant 0 : index
    %574 = vector.load %arg2[%c0_109, %c0_110] : memref<1x128xf32, #tpu.memory_space<vmem>>, vector<1x128xf32>
    tpu.vector_store %arg2[%c0_109, %c0_110], %573 {strides = array<i32>} : memref<1x128xf32, #tpu.memory_space<vmem>>, vector<1x128xf32>,
    return
  }
}

</mosaic_0001>

<llo_original>
// kernel: tpu_custom_call.1
$region0: #{tpu_custom_call.1}
  #allocation0 [shape = 'u32[]', space=smem, size = 0x4, offset = 0x4, fixed_abs, tag = 'smem constant byte address 0x4 - core index']
  #allocation1 [shape = 'u32[144,128]{1,0:T(1,128)}', space=vmem, size = 0x12000, scoped, tag = 'internal scratch']
  %s0 = inlined_call_operand.vmem [shape: f32[32,16], index: 0, kind: input, shape index: {}]
  %s1 = inlined_call_operand.vmem [shape: f32[32,4], index: 1, kind: input, shape index: {}]
  %s2 = inlined_call_operand.hbm [shape: f32[1,128], index: 2, kind: output, shape index: {}]
  %s3 = sld [smem:[#allocation0]]
  $region18: #{tpu_custom_call.1} parent=0
    _
  %s5 = ssub.s32 1, %s3
  %s6 = scalar_select 0, %s5, %s3
  $region1: #{tpu_custom_call.1} parent=0
    #allocation2 [shape = 'u8[512]{0}', space=vmem, size = 0x400, scoped, tag = 'output window, operand 0, single buffered']
    #allocation3 [shape = 's32[1]{0}', space=sflag, size = 0x4, scoped, tag = 'scoped memory for tpu_custom_call.1']
    %7 = vsyncpa [#allocation3], 0
    // Predicated region
    $region2: #{tpu_custom_call.1} parent=1 // pred_check
      _
    $region3: #{tpu_custom_call.1} parent=1 // pred_check_branch
      %9 = sbr.rel (0) target = $region5
    $region4: #{tpu_custom_call.1} parent=1 // pred_region
      _
    $region5: #{tpu_custom_call.1} parent=1 // pred_fallthru
      _
    // Predicated region
    $region6: #{tpu_custom_call.1} parent=1 // pred_check
      _
    $region7: #{tpu_custom_call.1} parent=1 // pred_check_branch
      %11 = sbr.rel (0) target = $region9
    $region8: #{tpu_custom_call.1} parent=1 // pred_region
      _
    $region9: #{tpu_custom_call.1} parent=1 // pred_fallthru
      _
    %v12 = vld [vmem:[%s0] sm:$0xff]
    %v13 = vld [vmem:[%s0 + $0x8] sm:$0xff]
    %v14 = vld [vmem:[%s0 + $0x10] sm:$0xff]
    %v15 = vld [vmem:[%s0 + $0x18] sm:$0xff]
    %v16 = vld [vmem:[%s1] sm:$0xff]
    %v17 = vld [vmem:[%s1 + $0x8] sm:$0xff]
    %v18 = vld [vmem:[%s1 + $0x10] sm:$0xff]
    %v19 = vld [vmem:[%s1 + $0x18] sm:$0xff]
    %vm20 = vcmask 130048
    %v22 = vsel %vm20, %v12, 0
    %v25 = vsel %vm20, %v13, 0
    %v28 = vsel %vm20, %v14, 0
    %v31 = vsel %vm20, %v15, 0
    %33 = vmatprep.subr.mxu0 0.0
    %34 = vmatpush1.xpose.msra.mxu0 %v22
    %35 = vmatprep.subr.mxu0 0.0
    %36 = vmatpush1.xpose.msra.mxu0 %v25
    %37 = vmatprep.subr.mxu0 0.0
    %38 = vmatpush1.xpose.msra.mxu0 %v28
    %39 = vmatprep.subr.mxu0 0.0
    %40 = vmatpush1.xpose.msra.mxu0 %v31
    %41 = vmatprep.subr.mxu0 0.0
    %42 = vmatpush1.xpose.msra.mxu0 0.0
    %43 = vmatprep.subr.mxu0 0.0
    %44 = vmatpush1.xpose.msra.mxu0 0.0
    %45 = vmatprep.subr.mxu0 0.0
    %46 = vmatpush1.xpose.msra.mxu0 0.0
    %47 = vmatprep.subr.mxu0 0.0
    %48 = vmatpush1.xpose.msra.mxu0 0.0
    %49 = vmatprep.subr.mxu0 0.0
    %50 = vmatpush1.xpose.msra.mxu0 0.0
    %51 = vmatprep.subr.mxu0 0.0
    %52 = vmatpush1.xpose.msra.mxu0 0.0
    %53 = vmatprep.subr.mxu0 0.0
    %54 = vmatpush1.xpose.msra.mxu0 0.0
    %55 = vmatprep.subr.mxu0 0.0
    %56 = vmatpush1.xpose.msra.mxu0 0.0
    %57 = vmatprep.subr.mxu0 0.0
    %58 = vmatpush1.xpose.msra.mxu0 0.0
    %59 = vmatprep.subr.mxu0 0.0
    %60 = vmatpush1.xpose.msra.mxu0 0.0
    %61 = vmatprep.subr.mxu0 0.0
    %62 = vmatpush1.xpose.msra.mxu0 0.0
    %63 = vmatprep.subr.mxu0 0.0
    %64 = vmatpush1.xpose.msra.mxu0 0.0
    %65 = vmatprep.subr.mxu0 0.0
    %66 = vmatpush1.xpose.msra.mxu0 0.0
    %67 = vmatprep.subr.mxu0 0.0
    %68 = vmatpush1.xpose.msra.mxu0 0.0
    %69 = vmatprep.subr.mxu0 0.0
    %70 = vmatpush1.xpose.msra.mxu0 0.0
    %71 = vmatprep.subr.mxu0 0.0
    %72 = vmatpush1.xpose.msra.mxu0 0.0
    %73 = vmatprep.subr.mxu0 0.0
    %74 = vmatpush1.xpose.msra.mxu0 0.0
    %75 = vmatprep.subr.mxu0 0.0
    %76 = vmatpush1.xpose.msra.mxu0 0.0
    %77 = vmatprep.subr.mxu0 0.0
    %78 = vmatpush1.xpose.msra.mxu0 0.0
    %79 = vmatprep.subr.mxu0 0.0
    %80 = vmatpush1.xpose.msra.mxu0 0.0
    %81 = vmatprep.subr.mxu0 0.0
    %82 = vmatpush1.xpose.msra.mxu0 0.0
    %83 = vmatprep.subr.mxu0 0.0
    %84 = vmatpush1.xpose.msra.mxu0 0.0
    %85 = vmatprep.subr.mxu0 0.0
    %86 = vmatpush1.xpose.msra.mxu0 0.0
    %87 = vmatprep.subr.mxu0 0.0
    %88 = vmatpush1.xpose.msra.mxu0 0.0
    %89 = vmatprep.subr.mxu0 0.0
    %90 = vmatpush1.xpose.msra.mxu0 0.0
    %91 = vmatprep.subr.mxu0 0.0
    %92 = vmatpush1.xpose.msra.mxu0 0.0
    %93 = vmatprep.subr.mxu0 0.0
    %94 = vmatpush1.xpose.msra.mxu0 0.0
    %95 = vmatprep.subr.mxu0 0.0
    %96 = vmatpush1.xpose.msra.mxu0 0.0
    %97 = vmatprep.mubr.f32.mxu0 0.0
    %98 = vmatmul.mubr.f32.gmra.mrb[0].mxu0 %v22
    %v99 = vpop.f32.mrb[0].mxu0
    %v100 = vadd.f32 0.0, %v99
    %v101 = vpop.f32.mrb[0].mxu0
    %102 = vmatprep.mubr.f32.mxu0 0.0
    %103 = vmatmul.mubr.f32.gmra.mrb[0].mxu0 %v25
    %v104 = vpop.f32.mrb[0].mxu0
    %v105 = vadd.f32 0.0, %v104
    %v106 = vpop.f32.mrb[0].mxu0
    %107 = vmatprep.mubr.f32.mxu0 0.0
    %108 = vmatmul.mubr.f32.gmra.mrb[0].mxu0 %v28
    %v109 = vpop.f32.mrb[0].mxu0
    %v110 = vadd.f32 0.0, %v109
    %v111 = vpop.f32.mrb[0].mxu0
    %112 = vmatprep.mubr.f32.mxu0 0.0
    %113 = vmatmul.mubr.f32.gmra.mrb[0].mxu0 %v31
    %v114 = vpop.f32.mrb[0].mxu0
    %v115 = vadd.f32 0.0, %v114
    %v116 = vpop.f32.mrb[0].mxu0
    %117 = vdwg.mxu0
    %v118 = vmul.f32 %v12, %v12
    %v119 = vmul.f32 %v13, %v13
    %v120 = vmul.f32 %v14, %v14
    %v121 = vmul.f32 %v15, %v15
    %v122 = vsel %vm20, %v118, 0.0
    %123 = vadd.xlane.f32.xlu0 %v122
    %v124 = vpop.xlane.xlu0 %123
    %v125 = vsel %vm20, %v119, 0.0
    %126 = vadd.xlane.f32.xlu0 %v125
    %v127 = vpop.xlane.xlu0 %126
    %v128 = vsel %vm20, %v120, 0.0
    %129 = vadd.xlane.f32.xlu0 %v128
    %v130 = vpop.xlane.xlu0 %129
    %v131 = vsel %vm20, %v121, 0.0
    %132 = vadd.xlane.f32.xlu0 %v131
    %v133 = vpop.xlane.xlu0 %132
    %v135 = vsel %vm20, 1.0, 0
    %v138 = vsel %vm20, %v118, 0
    %v141 = vsel %vm20, %v119, 0
    %v144 = vsel %vm20, %v120, 0
    %v147 = vsel %vm20, %v121, 0
    %149 = vmatprep.subr.mxu0 0.0
    %150 = vmatpush1.xpose.msra.mxu0 %v138
    %151 = vmatprep.subr.mxu0 0.0
    %152 = vmatpush1.xpose.msra.mxu0 %v141
    %153 = vmatprep.subr.mxu0 0.0
    %154 = vmatpush1.xpose.msra.mxu0 %v144
    %155 = vmatprep.subr.mxu0 0.0
    %156 = vmatpush1.xpose.msra.mxu0 %v147
    %157 = vmatprep.subr.mxu0 0.0
    %158 = vmatpush1.xpose.msra.mxu0 0.0
    %159 = vmatprep.subr.mxu0 0.0
    %160 = vmatpush1.xpose.msra.mxu0 0.0
    %161 = vmatprep.subr.mxu0 0.0
    %162 = vmatpush1.xpose.msra.mxu0 0.0
    %163 = vmatprep.subr.mxu0 0.0
    %164 = vmatpush1.xpose.msra.mxu0 0.0
    %165 = vmatprep.subr.mxu0 0.0
    %166 = vmatpush1.xpose.msra.mxu0 0.0
    %167 = vmatprep.subr.mxu0 0.0
    %168 = vmatpush1.xpose.msra.mxu0 0.0
    %169 = vmatprep.subr.mxu0 0.0
    %170 = vmatpush1.xpose.msra.mxu0 0.0
    %171 = vmatprep.subr.mxu0 0.0
    %172 = vmatpush1.xpose.msra.mxu0 0.0
    %173 = vmatprep.subr.mxu0 0.0
    %174 = vmatpush1.xpose.msra.mxu0 0.0
    %175 = vmatprep.subr.mxu0 0.0
    %176 = vmatpush1.xpose.msra.mxu0 0.0
    %177 = vmatprep.subr.mxu0 0.0
    %178 = vmatpush1.xpose.msra.mxu0 0.0
    %179 = vmatprep.subr.mxu0 0.0
    %180 = vmatpush1.xpose.msra.mxu0 0.0
    %181 = vmatprep.subr.mxu0 0.0
    %182 = vmatpush1.xpose.msra.mxu0 0.0
    %183 = vmatprep.subr.mxu0 0.0
    %184 = vmatpush1.xpose.msra.mxu0 0.0
    %185 = vmatprep.subr.mxu0 0.0
    %186 = vmatpush1.xpose.msra.mxu0 0.0
    %187 = vmatprep.subr.mxu0 0.0
    %188 = vmatpush1.xpose.msra.mxu0 0.0
    %189 = vmatprep.subr.mxu0 0.0
    %190 = vmatpush1.xpose.msra.mxu0 0.0
    %191 = vmatprep.subr.mxu0 0.0
    %192 = vmatpush1.xpose.msra.mxu0 0.0
    %193 = vmatprep.subr.mxu0 0.0
    %194 = vmatpush1.xpose.msra.mxu0 0.0
    %195 = vmatprep.subr.mxu0 0.0
    %196 = vmatpush1.xpose.msra.mxu0 0.0
    %197 = vmatprep.subr.mxu0 0.0
    %198 = vmatpush1.xpose.msra.mxu0 0.0
    %199 = vmatprep.subr.mxu0 0.0
    %200 = vmatpush1.xpose.msra.mxu0 0.0
    %201 = vmatprep.subr.mxu0 0.0
    %202 = vmatpush1.xpose.msra.mxu0 0.0
    %203 = vmatprep.subr.mxu0 0.0
    %204 = vmatpush1.xpose.msra.mxu0 0.0
    %205 = vmatprep.subr.mxu0 0.0
    %206 = vmatpush1.xpose.msra.mxu0 0.0
    %207 = vmatprep.subr.mxu0 0.0
    %208 = vmatpush1.xpose.msra.mxu0 0.0
    %209 = vmatprep.subr.mxu0 0.0
    %210 = vmatpush1.xpose.msra.mxu0 0.0
    %211 = vmatprep.subr.mxu0 0.0
    %212 = vmatpush1.xpose.msra.mxu0 0.0
    %213 = vmatprep.mubr.f32.mxu0 0.0
    %214 = vmatmul.mubr.f32.gmra.mrb[0].mxu0 %v135
    %v215 = vpop.f32.mrb[0].mxu0
    %v216 = vadd.f32 0.0, %v215
    %v217 = vpop.f32.mrb[0].mxu0
    %218 = vdwg.mxu0
    %v219 = vmul.f32 %v100, 2.0
    %v220 = vmul.f32 %v105, 2.0
    %v221 = vmul.f32 %v110, 2.0
    %v222 = vmul.f32 %v115, 2.0
    %v223 = vsub.f32 %v124, %v219
    %v224 = vsub.f32 %v127, %v220
    %v225 = vsub.f32 %v130, %v221
    %v226 = vsub.f32 %v133, %v222
    %v227 = vlaneseq
    %v228 = vshrl.u32 %v227, 7
    %v229 = vsub.s32 0, %v228
    %v230 = vrot.slane %v216, %v229
    %v231 = vadd.f32 %v223, %v230
    %v232 = vadd.f32 %v224, %v230
    %v233 = vadd.f32 %v225, %v230
    %v234 = vadd.f32 %v226, %v230
    %v235 = vmax.f32 %v231, 0.0
    %v236 = vmax.f32 %v232, 0.0
    %v237 = vmax.f32 %v233, 0.0
    %v238 = vmax.f32 %v234, 0.0
    %vm243 = vcmp.lt.s32.totalorder %v235, 1073741824
    %vm244 = vcmp.lt.s32.totalorder %v236, 1073741824
    %vm245 = vcmp.lt.s32.totalorder %v237, 1073741824
    %vm246 = vcmp.lt.s32.totalorder %v238, 1073741824
    %v247 = vsel %vm243, 1, 0
    %v248 = vsel %vm244, 1, 0
    %v249 = vsel %vm245, 1, 0
    %v250 = vsel %vm246, 1, 0
    %vm251 = vcmask 261120
    %v252 = vsel %vm251, %v247, 0
    %v253 = vsel %vm251, %v248, 0
    %v254 = vsel %vm251, %v249, 0
    %v255 = vsel %vm251, %v250, 0
    %v256 = vadd.s32 %v252, %v253
    %v257 = vadd.s32 %v254, %v255
    %v258 = vadd.s32 %v256, %v257
    %v259 = vand.u32 %v258, 65535
    %v260 = vshrl.u32 %v258, 16
    %v261 = vcvt.s32.f32 %v259
    %v262 = vcvt.s32.f32 %v260
    %263 = vadd.xlane.f32.xlu0 %v261
    %v264 = vpop.xlane.xlu0 %263
    %265 = vadd.xlane.f32.xlu0 %v262
    %v266 = vpop.xlane.xlu0 %265
    %v267 = vcvt.f32.s32 %v264
    %v268 = vcvt.f32.s32 %v266
    %v269 = vshll.u32 %v268, 16
    %v270 = vadd.s32 %v269, %v267
    %v271 = vrot.slane %v270, 4
    %v272 = vadd.s32 %v270, %v271
    %v273 = vrot.slane %v272, 2
    %v274 = vadd.s32 %v272, %v273
    %v275 = vrot.slane %v274, 1
    %v276 = vadd.s32 %v274, %v275
    %s277 = vtos %v276
    %v278 = vstv %s277
    %vm279 = vcmp.le.s32.totalorder %v278, 511
    %v280 = vsel %vm279, 1073741824, 0
    %v281 = vor.u32 %v280, 536870912
    %vm282 = vcmp.lt.s32.totalorder %v235, %v281
    %vm283 = vcmp.lt.s32.totalorder %v236, %v281
    %vm284 = vcmp.lt.s32.totalorder %v237, %v281
    %vm285 = vcmp.lt.s32.totalorder %v238, %v281
    %v286 = vsel %vm282, 1, 0
    %v287 = vsel %vm283, 1, 0
    %v288 = vsel %vm284, 1, 0
    %v289 = vsel %vm285, 1, 0
    %v290 = vsel %vm251, %v286, 0
    %v291 = vsel %vm251, %v287, 0
    %v292 = vsel %vm251, %v288, 0
    %v293 = vsel %vm251, %v289, 0
    %v294 = vadd.s32 %v290, %v291
    %v295 = vadd.s32 %v292, %v293
    %v296 = vadd.s32 %v294, %v295
    %v297 = vand.u32 %v296, 65535
    %v298 = vshrl.u32 %v296, 16
    %v299 = vcvt.s32.f32 %v297
    %v300 = vcvt.s32.f32 %v298
    %301 = vadd.xlane.f32.xlu0 %v299
    %v302 = vpop.xlane.xlu0 %301
    %303 = vadd.xlane.f32.xlu0 %v300
    %v304 = vpop.xlane.xlu0 %303
    %v305 = vcvt.f32.s32 %v302
    %v306 = vcvt.f32.s32 %v304
    %v307 = vshll.u32 %v306, 16
    %v308 = vadd.s32 %v307, %v305
    %v309 = vrot.slane %v308, 4
    %v310 = vadd.s32 %v308, %v309
    %v311 = vrot.slane %v310, 2
    %v312 = vadd.s32 %v310, %v311
    %v313 = vrot.slane %v312, 1
    %v314 = vadd.s32 %v312, %v313
    %s315 = vtos %v314
    %v316 = vstv %s315
    %vm317 = vcmp.le.s32.totalorder %v316, 511
    %v318 = vsel %vm317, %v281, %v280
    %v319 = vor.u32 %v318, 268435456
    %vm320 = vcmp.lt.s32.totalorder %v235, %v319
    %vm321 = vcmp.lt.s32.totalorder %v236, %v319
    %vm322 = vcmp.lt.s32.totalorder %v237, %v319
    %vm323 = vcmp.lt.s32.totalorder %v238, %v319
    %v324 = vsel %vm320, 1, 0
    %v325 = vsel %vm321, 1, 0
    %v326 = vsel %vm322, 1, 0
    %v327 = vsel %vm323, 1, 0
    %v328 = vsel %vm251, %v324, 0
    %v329 = vsel %vm251, %v325, 0
    %v330 = vsel %vm251, %v326, 0
    %v331 = vsel %vm251, %v327, 0
    %v332 = vadd.s32 %v328, %v329
    %v333 = vadd.s32 %v330, %v331
    %v334 = vadd.s32 %v332, %v333
    %v335 = vand.u32 %v334, 65535
    %v336 = vshrl.u32 %v334, 16
    %v337 = vcvt.s32.f32 %v335
    %v338 = vcvt.s32.f32 %v336
    %339 = vadd.xlane.f32.xlu0 %v337
    %v340 = vpop.xlane.xlu0 %339
    %341 = vadd.xlane.f32.xlu0 %v338
    %v342 = vpop.xlane.xlu0 %341
    %v343 = vcvt.f32.s32 %v340
    %v344 = vcvt.f32.s32 %v342
    %v345 = vshll.u32 %v344, 16
    %v346 = vadd.s32 %v345, %v343
    %v347 = vrot.slane %v346, 4
    %v348 = vadd.s32 %v346, %v347
    %v349 = vrot.slane %v348, 2
    %v350 = vadd.s32 %v348, %v349
    %v351 = vrot.slane %v350, 1
    %v352 = vadd.s32 %v350, %v351
    %s353 = vtos %v352
    %v354 = vstv %s353
    %vm355 = vcmp.le.s32.totalorder %v354, 511
    %v356 = vsel %vm355, %v319, %v318
    %v357 = vor.u32 %v356, 134217728
    %vm358 = vcmp.lt.s32.totalorder %v235, %v357
    %vm359 = vcmp.lt.s32.totalorder %v236, %v357
    %vm360 = vcmp.lt.s32.totalorder %v237, %v357
    %vm361 = vcmp.lt.s32.totalorder %v238, %v357
    %v362 = vsel %vm358, 1, 0
    %v363 = vsel %vm359, 1, 0
    %v364 = vsel %vm360, 1, 0
    %v365 = vsel %vm361, 1, 0
    %v366 = vsel %vm251, %v362, 0
    %v367 = vsel %vm251, %v363, 0
    %v368 = vsel %vm251, %v364, 0
    %v369 = vsel %vm251, %v365, 0
    %v370 = vadd.s32 %v366, %v367
    %v371 = vadd.s32 %v368, %v369
    %v372 = vadd.s32 %v370, %v371
    %v373 = vand.u32 %v372, 65535
    %v374 = vshrl.u32 %v372, 16
    %v375 = vcvt.s32.f32 %v373
    %v376 = vcvt.s32.f32 %v374
    %377 = vadd.xlane.f32.xlu0 %v375
    %v378 = vpop.xlane.xlu0 %377
    %379 = vadd.xlane.f32.xlu0 %v376
    %v380 = vpop.xlane.xlu0 %379
    %v381 = vcvt.f32.s32 %v378
    %v382 = vcvt.f32.s32 %v380
    %v383 = vshll.u32 %v382, 16
    %v384 = vadd.s32 %v383, %v381
    %v385 = vrot.slane %v384, 4
    %v386 = vadd.s32 %v384, %v385
    %v387 = vrot.slane %v386, 2
    %v388 = vadd.s32 %v386, %v387
    %v389 = vrot.slane %v388, 1
    %v390 = vadd.s32 %v388, %v389
    %s391 = vtos %v390
    %v392 = vstv %s391
    %vm393 = vcmp.le.s32.totalorder %v392, 511
    %v394 = vsel %vm393, %v357, %v356
    %v395 = vor.u32 %v394, 67108864
    %vm396 = vcmp.lt.s32.totalorder %v235, %v395
    %vm397 = vcmp.lt.s32.totalorder %v236, %v395
    %vm398 = vcmp.lt.s32.totalorder %v237, %v395
    %vm399 = vcmp.lt.s32.totalorder %v238, %v395
    %v400 = vsel %vm396, 1, 0
    %v401 = vsel %vm397, 1, 0
    %v402 = vsel %vm398, 1, 0
    %v403 = vsel %vm399, 1, 0
    %v404 = vsel %vm251, %v400, 0
    %v405 = vsel %vm251, %v401, 0
    %v406 = vsel %vm251, %v402, 0
    %v407 = vsel %vm251, %v403, 0
    %v408 = vadd.s32 %v404, %v405
    %v409 = vadd.s32 %v406, %v407
    %v410 = vadd.s32 %v408, %v409
    %v411 = vand.u32 %v410, 65535
    %v412 = vshrl.u32 %v410, 16
    %v413 = vcvt.s32.f32 %v411
    %v414 = vcvt.s32.f32 %v412
    %415 = vadd.xlane.f32.xlu0 %v413
    %v416 = vpop.xlane.xlu0 %415
    %417 = vadd.xlane.f32.xlu0 %v414
    %v418 = vpop.xlane.xlu0 %417
    %v419 = vcvt.f32.s32 %v416
    %v420 = vcvt.f32.s32 %v418
    %v421 = vshll.u32 %v420, 16
    %v422 = vadd.s32 %v421, %v419
    %v423 = vrot.slane %v422, 4
    %v424 = vadd.s32 %v422, %v423
    %v425 = vrot.slane %v424, 2
    %v426 = vadd.s32 %v424, %v425
    %v427 = vrot.slane %v426, 1
    %v428 = vadd.s32 %v426, %v427
    %s429 = vtos %v428
    %v430 = vstv %s429
    %vm431 = vcmp.le.s32.totalorder %v430, 511
    %v432 = vsel %vm431, %v395, %v394
    %v433 = vor.u32 %v432, 33554432
    %vm434 = vcmp.lt.s32.totalorder %v235, %v433
    %vm435 = vcmp.lt.s32.totalorder %v236, %v433
    %vm436 = vcmp.lt.s32.totalorder %v237, %v433
    %vm437 = vcmp.lt.s32.totalorder %v238, %v433
    %v438 = vsel %vm434, 1, 0
    %v439 = vsel %vm435, 1, 0
    %v440 = vsel %vm436, 1, 0
    %v441 = vsel %vm437, 1, 0
    %v442 = vsel %vm251, %v438, 0
    %v443 = vsel %vm251, %v439, 0
    %v444 = vsel %vm251, %v440, 0
    %v445 = vsel %vm251, %v441, 0
    %v446 = vadd.s32 %v442, %v443
    %v447 = vadd.s32 %v444, %v445
    %v448 = vadd.s32 %v446, %v447
    %v449 = vand.u32 %v448, 65535
    %v450 = vshrl.u32 %v448, 16
    %v451 = vcvt.s32.f32 %v449
    %v452 = vcvt.s32.f32 %v450
    %453 = vadd.xlane.f32.xlu0 %v451
    %v454 = vpop.xlane.xlu0 %453
    %455 = vadd.xlane.f32.xlu0 %v452
    %v456 = vpop.xlane.xlu0 %455
    %v457 = vcvt.f32.s32 %v454
    %v458 = vcvt.f32.s32 %v456
    %v459 = vshll.u32 %v458, 16
    %v460 = vadd.s32 %v459, %v457
    %v461 = vrot.slane %v460, 4
    %v462 = vadd.s32 %v460, %v461
    %v463 = vrot.slane %v462, 2
    %v464 = vadd.s32 %v462, %v463
    %v465 = vrot.slane %v464, 1
    %v466 = vadd.s32 %v464, %v465
    %s467 = vtos %v466
    %v468 = vstv %s467
    %vm469 = vcmp.le.s32.totalorder %v468, 511
    %v470 = vsel %vm469, %v433, %v432
    %v471 = vor.u32 %v470, 16777216
    %vm472 = vcmp.lt.s32.totalorder %v235, %v471
    %vm473 = vcmp.lt.s32.totalorder %v236, %v471
    %vm474 = vcmp.lt.s32.totalorder %v237, %v471
    %vm475 = vcmp.lt.s32.totalorder %v238, %v471
    %v476 = vsel %vm472, 1, 0
    %v477 = vsel %vm473, 1, 0
    %v478 = vsel %vm474, 1, 0
    %v479 = vsel %vm475, 1, 0
    %v480 = vsel %vm251, %v476, 0
    %v481 = vsel %vm251, %v477, 0
    %v482 = vsel %vm251, %v478, 0
    %v483 = vsel %vm251, %v479, 0
    %v484 = vadd.s32 %v480, %v481
    %v485 = vadd.s32 %v482, %v483
    %v486 = vadd.s32 %v484, %v485
    %v487 = vand.u32 %v486, 65535
    %v488 = vshrl.u32 %v486, 16
    %v489 = vcvt.s32.f32 %v487
    %v490 = vcvt.s32.f32 %v488
    %491 = vadd.xlane.f32.xlu0 %v489
    %v492 = vpop.xlane.xlu0 %491
    %493 = vadd.xlane.f32.xlu0 %v490
    %v494 = vpop.xlane.xlu0 %493
    %v495 = vcvt.f32.s32 %v492
    %v496 = vcvt.f32.s32 %v494
    %v497 = vshll.u32 %v496, 16
    %v498 = vadd.s32 %v497, %v495
    %v499 = vrot.slane %v498, 4
    %v500 = vadd.s32 %v498, %v499
    %v501 = vrot.slane %v500, 2
    %v502 = vadd.s32 %v500, %v501
    %v503 = vrot.slane %v502, 1
    %v504 = vadd.s32 %v502, %v503
    %s505 = vtos %v504
    %v506 = vstv %s505
    %vm507 = vcmp.le.s32.totalorder %v506, 511
    %v508 = vsel %vm507, %v471, %v470
    %v509 = vor.u32 %v508, 8388608
    %vm510 = vcmp.lt.s32.totalorder %v235, %v509
    %vm511 = vcmp.lt.s32.totalorder %v236, %v509
    %vm512 = vcmp.lt.s32.totalorder %v237, %v509
    %vm513 = vcmp.lt.s32.totalorder %v238, %v509
    %v514 = vsel %vm510, 1, 0
    %v515 = vsel %vm511, 1, 0
    %v516 = vsel %vm512, 1, 0
    %v517 = vsel %vm513, 1, 0
    %v518 = vsel %vm251, %v514, 0
    %v519 = vsel %vm251, %v515, 0
    %v520 = vsel %vm251, %v516, 0
    %v521 = vsel %vm251, %v517, 0
    %v522 = vadd.s32 %v518, %v519
    %v523 = vadd.s32 %v520, %v521
    %v524 = vadd.s32 %v522, %v523
    %v525 = vand.u32 %v524, 65535
    %v526 = vshrl.u32 %v524, 16
    %v527 = vcvt.s32.f32 %v525
    %v528 = vcvt.s32.f32 %v526
    %529 = vadd.xlane.f32.xlu0 %v527
    %v530 = vpop.xlane.xlu0 %529
    %531 = vadd.xlane.f32.xlu0 %v528
    %v532 = vpop.xlane.xlu0 %531
    %v533 = vcvt.f32.s32 %v530
    %v534 = vcvt.f32.s32 %v532
    %v535 = vshll.u32 %v534, 16
    %v536 = vadd.s32 %v535, %v533
    %v537 = vrot.slane %v536, 4
    %v538 = vadd.s32 %v536, %v537
    %v539 = vrot.slane %v538, 2
    %v540 = vadd.s32 %v538, %v539
    %v541 = vrot.slane %v540, 1
    %v542 = vadd.s32 %v540, %v541
    %s543 = vtos %v542
    %v544 = vstv %s543
    %vm545 = vcmp.le.s32.totalorder %v544, 511
    %v546 = vsel %vm545, %v509, %v508
    %v547 = vor.u32 %v546, 4194304
    %vm548 = vcmp.lt.s32.totalorder %v235, %v547
    %vm549 = vcmp.lt.s32.totalorder %v236, %v547
    %vm550 = vcmp.lt.s32.totalorder %v237, %v547
    %vm551 = vcmp.lt.s32.totalorder %v238, %v547
    %v552 = vsel %vm548, 1, 0
    %v553 = vsel %vm549, 1, 0
    %v554 = vsel %vm550, 1, 0
    %v555 = vsel %vm551, 1, 0
    %v556 = vsel %vm251, %v552, 0
    %v557 = vsel %vm251, %v553, 0
    %v558 = vsel %vm251, %v554, 0
    %v559 = vsel %vm251, %v555, 0
    %v560 = vadd.s32 %v556, %v557
    %v561 = vadd.s32 %v558, %v559
    %v562 = vadd.s32 %v560, %v561
    %v563 = vand.u32 %v562, 65535
    %v564 = vshrl.u32 %v562, 16
    %v565 = vcvt.s32.f32 %v563
    %v566 = vcvt.s32.f32 %v564
    %567 = vadd.xlane.f32.xlu0 %v565
    %v568 = vpop.xlane.xlu0 %567
    %569 = vadd.xlane.f32.xlu0 %v566
    %v570 = vpop.xlane.xlu0 %569
    %v571 = vcvt.f32.s32 %v568
    %v572 = vcvt.f32.s32 %v570
    %v573 = vshll.u32 %v572, 16
    %v574 = vadd.s32 %v573, %v571
    %v575 = vrot.slane %v574, 4
    %v576 = vadd.s32 %v574, %v575
    %v577 = vrot.slane %v576, 2
    %v578 = vadd.s32 %v576, %v577
    %v579 = vrot.slane %v578, 1
    %v580 = vadd.s32 %v578, %v579
    %s581 = vtos %v580
    %v582 = vstv %s581
    %vm583 = vcmp.le.s32.totalorder %v582, 511
    %v584 = vsel %vm583, %v547, %v546
    %v585 = vor.u32 %v584, 2097152
    %vm586 = vcmp.lt.s32.totalorder %v235, %v585
    %vm587 = vcmp.lt.s32.totalorder %v236, %v585
    %vm588 = vcmp.lt.s32.totalorder %v237, %v585
    %vm589 = vcmp.lt.s32.totalorder %v238, %v585
    %v590 = vsel %vm586, 1, 0
    %v591 = vsel %vm587, 1, 0
    %v592 = vsel %vm588, 1, 0
    %v593 = vsel %vm589, 1, 0
    %v594 = vsel %vm251, %v590, 0
    %v595 = vsel %vm251, %v591, 0
    %v596 = vsel %vm251, %v592, 0
    %v597 = vsel %vm251, %v593, 0
    %v598 = vadd.s32 %v594, %v595
    %v599 = vadd.s32 %v596, %v597
    %v600 = vadd.s32 %v598, %v599
    %v601 = vand.u32 %v600, 65535
    %v602 = vshrl.u32 %v600, 16
    %v603 = vcvt.s32.f32 %v601
    %v604 = vcvt.s32.f32 %v602
    %605 = vadd.xlane.f32.xlu0 %v603
    %v606 = vpop.xlane.xlu0 %605
    %607 = vadd.xlane.f32.xlu0 %v604
    %v608 = vpop.xlane.xlu0 %607
    %v609 = vcvt.f32.s32 %v606
    %v610 = vcvt.f32.s32 %v608
    %v611 = vshll.u32 %v610, 16
    %v612 = vadd.s32 %v611, %v609
    %v613 = vrot.slane %v612, 4
    %v614 = vadd.s32 %v612, %v613
    %v615 = vrot.slane %v614, 2
    %v616 = vadd.s32 %v614, %v615
    %v617 = vrot.slane %v616, 1
    %v618 = vadd.s32 %v616, %v617
    %s619 = vtos %v618
    %v620 = vstv %s619
    %vm621 = vcmp.le.s32.totalorder %v620, 511
    %v622 = vsel %vm621, %v585, %v584
    %v623 = vor.u32 %v622, 1048576
    %vm624 = vcmp.lt.s32.totalorder %v235, %v623
    %vm625 = vcmp.lt.s32.totalorder %v236, %v623
    %vm626 = vcmp.lt.s32.totalorder %v237, %v623
    %vm627 = vcmp.lt.s32.totalorder %v238, %v623
    %v628 = vsel %vm624, 1, 0
    %v629 = vsel %vm625, 1, 0
    %v630 = vsel %vm626, 1, 0
    %v631 = vsel %vm627, 1, 0
    %v632 = vsel %vm251, %v628, 0
    %v633 = vsel %vm251, %v629, 0
    %v634 = vsel %vm251, %v630, 0
    %v635 = vsel %vm251, %v631, 0
    %v636 = vadd.s32 %v632, %v633
    %v637 = vadd.s32 %v634, %v635
    %v638 = vadd.s32 %v636, %v637
    %v639 = vand.u32 %v638, 65535
    %v640 = vshrl.u32 %v638, 16
    %v641 = vcvt.s32.f32 %v639
    %v642 = vcvt.s32.f32 %v640
    %643 = vadd.xlane.f32.xlu0 %v641
    %v644 = vpop.xlane.xlu0 %643
    %645 = vadd.xlane.f32.xlu0 %v642
    %v646 = vpop.xlane.xlu0 %645
    %v647 = vcvt.f32.s32 %v644
    %v648 = vcvt.f32.s32 %v646
    %v649 = vshll.u32 %v648, 16
    %v650 = vadd.s32 %v649, %v647
    %v651 = vrot.slane %v650, 4
    %v652 = vadd.s32 %v650, %v651
    %v653 = vrot.slane %v652, 2
    %v654 = vadd.s32 %v652, %v653
    %v655 = vrot.slane %v654, 1
    %v656 = vadd.s32 %v654, %v655
    %s657 = vtos %v656
    %v658 = vstv %s657
    %vm659 = vcmp.le.s32.totalorder %v658, 511
    %v660 = vsel %vm659, %v623, %v622
    %v661 = vor.u32 %v660, 524288
    %vm662 = vcmp.lt.s32.totalorder %v235, %v661
    %vm663 = vcmp.lt.s32.totalorder %v236, %v661
    %vm664 = vcmp.lt.s32.totalorder %v237, %v661
    %vm665 = vcmp.lt.s32.totalorder %v238, %v661
    %v666 = vsel %vm662, 1, 0
    %v667 = vsel %vm663, 1, 0
    %v668 = vsel %vm664, 1, 0
    %v669 = vsel %vm665, 1, 0
    %v670 = vsel %vm251, %v666, 0
    %v671 = vsel %vm251, %v667, 0
    %v672 = vsel %vm251, %v668, 0
    %v673 = vsel %vm251, %v669, 0
    %v674 = vadd.s32 %v670, %v671
    %v675 = vadd.s32 %v672, %v673
    %v676 = vadd.s32 %v674, %v675
    %v677 = vand.u32 %v676, 65535
    %v678 = vshrl.u32 %v676, 16
    %v679 = vcvt.s32.f32 %v677
    %v680 = vcvt.s32.f32 %v678
    %681 = vadd.xlane.f32.xlu0 %v679
    %v682 = vpop.xlane.xlu0 %681
    %683 = vadd.xlane.f32.xlu0 %v680
    %v684 = vpop.xlane.xlu0 %683
    %v685 = vcvt.f32.s32 %v682
    %v686 = vcvt.f32.s32 %v684
    %v687 = vshll.u32 %v686, 16
    %v688 = vadd.s32 %v687, %v685
    %v689 = vrot.slane %v688, 4
    %v690 = vadd.s32 %v688, %v689
    %v691 = vrot.slane %v690, 2
    %v692 = vadd.s32 %v690, %v691
    %v693 = vrot.slane %v692, 1
    %v694 = vadd.s32 %v692, %v693
    %s695 = vtos %v694
    %v696 = vstv %s695
    %vm697 = vcmp.le.s32.totalorder %v696, 511
    %v698 = vsel %vm697, %v661, %v660
    %v699 = vor.u32 %v698, 262144
    %vm700 = vcmp.lt.s32.totalorder %v235, %v699
    %vm701 = vcmp.lt.s32.totalorder %v236, %v699
    %vm702 = vcmp.lt.s32.totalorder %v237, %v699
    %vm703 = vcmp.lt.s32.totalorder %v238, %v699
    %v704 = vsel %vm700, 1, 0
    %v705 = vsel %vm701, 1, 0
    %v706 = vsel %vm702, 1, 0
    %v707 = vsel %vm703, 1, 0
    %v708 = vsel %vm251, %v704, 0
    %v709 = vsel %vm251, %v705, 0
    %v710 = vsel %vm251, %v706, 0
    %v711 = vsel %vm251, %v707, 0
    %v712 = vadd.s32 %v708, %v709
    %v713 = vadd.s32 %v710, %v711
    %v714 = vadd.s32 %v712, %v713
    %v715 = vand.u32 %v714, 65535
    %v716 = vshrl.u32 %v714, 16
    %v717 = vcvt.s32.f32 %v715
    %v718 = vcvt.s32.f32 %v716
    %719 = vadd.xlane.f32.xlu0 %v717
    %v720 = vpop.xlane.xlu0 %719
    %721 = vadd.xlane.f32.xlu0 %v718
    %v722 = vpop.xlane.xlu0 %721
    %v723 = vcvt.f32.s32 %v720
    %v724 = vcvt.f32.s32 %v722
    %v725 = vshll.u32 %v724, 16
    %v726 = vadd.s32 %v725, %v723
    %v727 = vrot.slane %v726, 4
    %v728 = vadd.s32 %v726, %v727
    %v729 = vrot.slane %v728, 2
    %v730 = vadd.s32 %v728, %v729
    %v731 = vrot.slane %v730, 1
    %v732 = vadd.s32 %v730, %v731
    %s733 = vtos %v732
    %v734 = vstv %s733
    %vm735 = vcmp.le.s32.totalorder %v734, 511
    %v736 = vsel %vm735, %v699, %v698
    %v737 = vor.u32 %v736, 131072
    %vm738 = vcmp.lt.s32.totalorder %v235, %v737
    %vm739 = vcmp.lt.s32.totalorder %v236, %v737
    %vm740 = vcmp.lt.s32.totalorder %v237, %v737
    %vm741 = vcmp.lt.s32.totalorder %v238, %v737
    %v742 = vsel %vm738, 1, 0
    %v743 = vsel %vm739, 1, 0
    %v744 = vsel %vm740, 1, 0
    %v745 = vsel %vm741, 1, 0
    %v746 = vsel %vm251, %v742, 0
    %v747 = vsel %vm251, %v743, 0
    %v748 = vsel %vm251, %v744, 0
    %v749 = vsel %vm251, %v745, 0
    %v750 = vadd.s32 %v746, %v747
    %v751 = vadd.s32 %v748, %v749
    %v752 = vadd.s32 %v750, %v751
    %v753 = vand.u32 %v752, 65535
    %v754 = vshrl.u32 %v752, 16
    %v755 = vcvt.s32.f32 %v753
    %v756 = vcvt.s32.f32 %v754
    %757 = vadd.xlane.f32.xlu0 %v755
    %v758 = vpop.xlane.xlu0 %757
    %759 = vadd.xlane.f32.xlu0 %v756
    %v760 = vpop.xlane.xlu0 %759
    %v761 = vcvt.f32.s32 %v758
    %v762 = vcvt.f32.s32 %v760
    %v763 = vshll.u32 %v762, 16
    %v764 = vadd.s32 %v763, %v761
    %v765 = vrot.slane %v764, 4
    %v766 = vadd.s32 %v764, %v765
    %v767 = vrot.slane %v766, 2
    %v768 = vadd.s32 %v766, %v767
    %v769 = vrot.slane %v768, 1
    %v770 = vadd.s32 %v768, %v769
    %s771 = vtos %v770
    %v772 = vstv %s771
    %vm773 = vcmp.le.s32.totalorder %v772, 511
    %v774 = vsel %vm773, %v737, %v736
    %v775 = vor.u32 %v774, 65536
    %vm776 = vcmp.lt.s32.totalorder %v235, %v775
    %vm777 = vcmp.lt.s32.totalorder %v236, %v775
    %vm778 = vcmp.lt.s32.totalorder %v237, %v775
    %vm779 = vcmp.lt.s32.totalorder %v238, %v775
    %v780 = vsel %vm776, 1, 0
    %v781 = vsel %vm777, 1, 0
    %v782 = vsel %vm778, 1, 0
    %v783 = vsel %vm779, 1, 0
    %v784 = vsel %vm251, %v780, 0
    %v785 = vsel %vm251, %v781, 0
    %v786 = vsel %vm251, %v782, 0
    %v787 = vsel %vm251, %v783, 0
    %v788 = vadd.s32 %v784, %v785
    %v789 = vadd.s32 %v786, %v787
    %v790 = vadd.s32 %v788, %v789
    %v791 = vand.u32 %v790, 65535
    %v792 = vshrl.u32 %v790, 16
    %v793 = vcvt.s32.f32 %v791
    %v794 = vcvt.s32.f32 %v792
    %795 = vadd.xlane.f32.xlu0 %v793
    %v796 = vpop.xlane.xlu0 %795
    %797 = vadd.xlane.f32.xlu0 %v794
    %v798 = vpop.xlane.xlu0 %797
    %v799 = vcvt.f32.s32 %v796
    %v800 = vcvt.f32.s32 %v798
    %v801 = vshll.u32 %v800, 16
    %v802 = vadd.s32 %v801, %v799
    %v803 = vrot.slane %v802, 4
    %v804 = vadd.s32 %v802, %v803
    %v805 = vrot.slane %v804, 2
    %v806 = vadd.s32 %v804, %v805
    %v807 = vrot.slane %v806, 1
    %v808 = vadd.s32 %v806, %v807
    %s809 = vtos %v808
    %v810 = vstv %s809
    %vm811 = vcmp.le.s32.totalorder %v810, 511
    %v812 = vsel %vm811, %v775, %v774
    %v813 = vor.u32 %v812, 32768
    %vm814 = vcmp.lt.s32.totalorder %v235, %v813
    %vm815 = vcmp.lt.s32.totalorder %v236, %v813
    %vm816 = vcmp.lt.s32.totalorder %v237, %v813
    %vm817 = vcmp.lt.s32.totalorder %v238, %v813
    %v818 = vsel %vm814, 1, 0
    %v819 = vsel %vm815, 1, 0
    %v820 = vsel %vm816, 1, 0
    %v821 = vsel %vm817, 1, 0
    %v822 = vsel %vm251, %v818, 0
    %v823 = vsel %vm251, %v819, 0
    %v824 = vsel %vm251, %v820, 0
    %v825 = vsel %vm251, %v821, 0
    %v826 = vadd.s32 %v822, %v823
    %v827 = vadd.s32 %v824, %v825
    %v828 = vadd.s32 %v826, %v827
    %v829 = vand.u32 %v828, 65535
    %v830 = vshrl.u32 %v828, 16
    %v831 = vcvt.s32.f32 %v829
    %v832 = vcvt.s32.f32 %v830
    %833 = vadd.xlane.f32.xlu0 %v831
    %v834 = vpop.xlane.xlu0 %833
    %835 = vadd.xlane.f32.xlu0 %v832
    %v836 = vpop.xlane.xlu0 %835
    %v837 = vcvt.f32.s32 %v834
    %v838 = vcvt.f32.s32 %v836
    %v839 = vshll.u32 %v838, 16
    %v840 = vadd.s32 %v839, %v837
    %v841 = vrot.slane %v840, 4
    %v842 = vadd.s32 %v840, %v841
    %v843 = vrot.slane %v842, 2
    %v844 = vadd.s32 %v842, %v843
    %v845 = vrot.slane %v844, 1
    %v846 = vadd.s32 %v844, %v845
    %s847 = vtos %v846
    %v848 = vstv %s847
    %vm849 = vcmp.le.s32.totalorder %v848, 511
    %v850 = vsel %vm849, %v813, %v812
    %v851 = vor.u32 %v850, 16384
    %vm852 = vcmp.lt.s32.totalorder %v235, %v851
    %vm853 = vcmp.lt.s32.totalorder %v236, %v851
    %vm854 = vcmp.lt.s32.totalorder %v237, %v851
    %vm855 = vcmp.lt.s32.totalorder %v238, %v851
    %v856 = vsel %vm852, 1, 0
    %v857 = vsel %vm853, 1, 0
    %v858 = vsel %vm854, 1, 0
    %v859 = vsel %vm855, 1, 0
    %v860 = vsel %vm251, %v856, 0
    %v861 = vsel %vm251, %v857, 0
    %v862 = vsel %vm251, %v858, 0
    %v863 = vsel %vm251, %v859, 0
    %v864 = vadd.s32 %v860, %v861
    %v865 = vadd.s32 %v862, %v863
    %v866 = vadd.s32 %v864, %v865
    %v867 = vand.u32 %v866, 65535
    %v868 = vshrl.u32 %v866, 16
    %v869 = vcvt.s32.f32 %v867
    %v870 = vcvt.s32.f32 %v868
    %871 = vadd.xlane.f32.xlu0 %v869
    %v872 = vpop.xlane.xlu0 %871
    %873 = vadd.xlane.f32.xlu0 %v870
    %v874 = vpop.xlane.xlu0 %873
    %v875 = vcvt.f32.s32 %v872
    %v876 = vcvt.f32.s32 %v874
    %v877 = vshll.u32 %v876, 16
    %v878 = vadd.s32 %v877, %v875
    %v879 = vrot.slane %v878, 4
    %v880 = vadd.s32 %v878, %v879
    %v881 = vrot.slane %v880, 2
    %v882 = vadd.s32 %v880, %v881
    %v883 = vrot.slane %v882, 1
    %v884 = vadd.s32 %v882, %v883
    %s885 = vtos %v884
    %v886 = vstv %s885
    %vm887 = vcmp.le.s32.totalorder %v886, 511
    %v888 = vsel %vm887, %v851, %v850
    %v889 = vor.u32 %v888, 8192
    %vm890 = vcmp.lt.s32.totalorder %v235, %v889
    %vm891 = vcmp.lt.s32.totalorder %v236, %v889
    %vm892 = vcmp.lt.s32.totalorder %v237, %v889
    %vm893 = vcmp.lt.s32.totalorder %v238, %v889
    %v894 = vsel %vm890, 1, 0
    %v895 = vsel %vm891, 1, 0
    %v896 = vsel %vm892, 1, 0
    %v897 = vsel %vm893, 1, 0
    %v898 = vsel %vm251, %v894, 0
    %v899 = vsel %vm251, %v895, 0
    %v900 = vsel %vm251, %v896, 0
    %v901 = vsel %vm251, %v897, 0
    %v902 = vadd.s32 %v898, %v899
    %v903 = vadd.s32 %v900, %v901
    %v904 = vadd.s32 %v902, %v903
    %v905 = vand.u32 %v904, 65535
    %v906 = vshrl.u32 %v904, 16
    %v907 = vcvt.s32.f32 %v905
    %v908 = vcvt.s32.f32 %v906
    %909 = vadd.xlane.f32.xlu0 %v907
    %v910 = vpop.xlane.xlu0 %909
    %911 = vadd.xlane.f32.xlu0 %v908
    %v912 = vpop.xlane.xlu0 %911
    %v913 = vcvt.f32.s32 %v910
    %v914 = vcvt.f32.s32 %v912
    %v915 = vshll.u32 %v914, 16
    %v916 = vadd.s32 %v915, %v913
    %v917 = vrot.slane %v916, 4
    %v918 = vadd.s32 %v916, %v917
    %v919 = vrot.slane %v918, 2
    %v920 = vadd.s32 %v918, %v919
    %v921 = vrot.slane %v920, 1
    %v922 = vadd.s32 %v920, %v921
    %s923 = vtos %v922
    %v924 = vstv %s923
    %vm925 = vcmp.le.s32.totalorder %v924, 511
    %v926 = vsel %vm925, %v889, %v888
    %v927 = vor.u32 %v926, 4096
    %vm928 = vcmp.lt.s32.totalorder %v235, %v927
    %vm929 = vcmp.lt.s32.totalorder %v236, %v927
    %vm930 = vcmp.lt.s32.totalorder %v237, %v927
    %vm931 = vcmp.lt.s32.totalorder %v238, %v927
    %v932 = vsel %vm928, 1, 0
    %v933 = vsel %vm929, 1, 0
    %v934 = vsel %vm930, 1, 0
    %v935 = vsel %vm931, 1, 0
    %v936 = vsel %vm251, %v932, 0
    %v937 = vsel %vm251, %v933, 0
    %v938 = vsel %vm251, %v934, 0
    %v939 = vsel %vm251, %v935, 0
    %v940 = vadd.s32 %v936, %v937
    %v941 = vadd.s32 %v938, %v939
    %v942 = vadd.s32 %v940, %v941
    %v943 = vand.u32 %v942, 65535
    %v944 = vshrl.u32 %v942, 16
    %v945 = vcvt.s32.f32 %v943
    %v946 = vcvt.s32.f32 %v944
    %947 = vadd.xlane.f32.xlu0 %v945
    %v948 = vpop.xlane.xlu0 %947
    %949 = vadd.xlane.f32.xlu0 %v946
    %v950 = vpop.xlane.xlu0 %949
    %v951 = vcvt.f32.s32 %v948
    %v952 = vcvt.f32.s32 %v950
    %v953 = vshll.u32 %v952, 16
    %v954 = vadd.s32 %v953, %v951
    %v955 = vrot.slane %v954, 4
    %v956 = vadd.s32 %v954, %v955
    %v957 = vrot.slane %v956, 2
    %v958 = vadd.s32 %v956, %v957
    %v959 = vrot.slane %v958, 1
    %v960 = vadd.s32 %v958, %v959
    %s961 = vtos %v960
    %v962 = vstv %s961
    %vm963 = vcmp.le.s32.totalorder %v962, 511
    %v964 = vsel %vm963, %v927, %v926
    %v965 = vor.u32 %v964, 2048
    %vm966 = vcmp.lt.s32.totalorder %v235, %v965
    %vm967 = vcmp.lt.s32.totalorder %v236, %v965
    %vm968 = vcmp.lt.s32.totalorder %v237, %v965
    %vm969 = vcmp.lt.s32.totalorder %v238, %v965
    %v970 = vsel %vm966, 1, 0
    %v971 = vsel %vm967, 1, 0
    %v972 = vsel %vm968, 1, 0
    %v973 = vsel %vm969, 1, 0
    %v974 = vsel %vm251, %v970, 0
    %v975 = vsel %vm251, %v971, 0
    %v976 = vsel %vm251, %v972, 0
    %v977 = vsel %vm251, %v973, 0
    %v978 = vadd.s32 %v974, %v975
    %v979 = vadd.s32 %v976, %v977
    %v980 = vadd.s32 %v978, %v979
    %v981 = vand.u32 %v980, 65535
    %v982 = vshrl.u32 %v980, 16
    %v983 = vcvt.s32.f32 %v981
    %v984 = vcvt.s32.f32 %v982
    %985 = vadd.xlane.f32.xlu0 %v983
    %v986 = vpop.xlane.xlu0 %985
    %987 = vadd.xlane.f32.xlu0 %v984
    %v988 = vpop.xlane.xlu0 %987
    %v989 = vcvt.f32.s32 %v986
    %v990 = vcvt.f32.s32 %v988
    %v991 = vshll.u32 %v990, 16
    %v992 = vadd.s32 %v991, %v989
    %v993 = vrot.slane %v992, 4
    %v994 = vadd.s32 %v992, %v993
    %v995 = vrot.slane %v994, 2
    %v996 = vadd.s32 %v994, %v995
    %v997 = vrot.slane %v996, 1
    %v998 = vadd.s32 %v996, %v997
    %s999 = vtos %v998
    %v1000 = vstv %s999
    %vm1001 = vcmp.le.s32.totalorder %v1000, 511
    %v1002 = vsel %vm1001, %v965, %v964
    %v1003 = vor.u32 %v1002, 1024
    %vm1004 = vcmp.lt.s32.totalorder %v235, %v1003
    %vm1005 = vcmp.lt.s32.totalorder %v236, %v1003
    %vm1006 = vcmp.lt.s32.totalorder %v237, %v1003
    %vm1007 = vcmp.lt.s32.totalorder %v238, %v1003
    %v1008 = vsel %vm1004, 1, 0
    %v1009 = vsel %vm1005, 1, 0
    %v1010 = vsel %vm1006, 1, 0
    %v1011 = vsel %vm1007, 1, 0
    %v1012 = vsel %vm251, %v1008, 0
    %v1013 = vsel %vm251, %v1009, 0
    %v1014 = vsel %vm251, %v1010, 0
    %v1015 = vsel %vm251, %v1011, 0
    %v1016 = vadd.s32 %v1012, %v1013
    %v1017 = vadd.s32 %v1014, %v1015
    %v1018 = vadd.s32 %v1016, %v1017
    %v1019 = vand.u32 %v1018, 65535
    %v1020 = vshrl.u32 %v1018, 16
    %v1021 = vcvt.s32.f32 %v1019
    %v1022 = vcvt.s32.f32 %v1020
    %1023 = vadd.xlane.f32.xlu0 %v1021
    %v1024 = vpop.xlane.xlu0 %1023
    %1025 = vadd.xlane.f32.xlu0 %v1022
    %v1026 = vpop.xlane.xlu0 %1025
    %v1027 = vcvt.f32.s32 %v1024
    %v1028 = vcvt.f32.s32 %v1026
    %v1029 = vshll.u32 %v1028, 16
    %v1030 = vadd.s32 %v1029, %v1027
    %v1031 = vrot.slane %v1030, 4
    %v1032 = vadd.s32 %v1030, %v1031
    %v1033 = vrot.slane %v1032, 2
    %v1034 = vadd.s32 %v1032, %v1033
    %v1035 = vrot.slane %v1034, 1
    %v1036 = vadd.s32 %v1034, %v1035
    %s1037 = vtos %v1036
    %v1038 = vstv %s1037
    %vm1039 = vcmp.le.s32.totalorder %v1038, 511
    %v1040 = vsel %vm1039, %v1003, %v1002
    %v1041 = vor.u32 %v1040, 512
    %vm1042 = vcmp.lt.s32.totalorder %v235, %v1041
    %vm1043 = vcmp.lt.s32.totalorder %v236, %v1041
    %vm1044 = vcmp.lt.s32.totalorder %v237, %v1041
    %vm1045 = vcmp.lt.s32.totalorder %v238, %v1041
    %v1046 = vsel %vm1042, 1, 0
    %v1047 = vsel %vm1043, 1, 0
    %v1048 = vsel %vm1044, 1, 0
    %v1049 = vsel %vm1045, 1, 0
    %v1050 = vsel %vm251, %v1046, 0
    %v1051 = vsel %vm251, %v1047, 0
    %v1052 = vsel %vm251, %v1048, 0
    %v1053 = vsel %vm251, %v1049, 0
    %v1054 = vadd.s32 %v1050, %v1051
    %v1055 = vadd.s32 %v1052, %v1053
    %v1056 = vadd.s32 %v1054, %v1055
    %v1057 = vand.u32 %v1056, 65535
    %v1058 = vshrl.u32 %v1056, 16
    %v1059 = vcvt.s32.f32 %v1057
    %v1060 = vcvt.s32.f32 %v1058
    %1061 = vadd.xlane.f32.xlu0 %v1059
    %v1062 = vpop.xlane.xlu0 %1061
    %1063 = vadd.xlane.f32.xlu0 %v1060
    %v1064 = vpop.xlane.xlu0 %1063
    %v1065 = vcvt.f32.s32 %v1062
    %v1066 = vcvt.f32.s32 %v1064
    %v1067 = vshll.u32 %v1066, 16
    %v1068 = vadd.s32 %v1067, %v1065
    %v1069 = vrot.slane %v1068, 4
    %v1070 = vadd.s32 %v1068, %v1069
    %v1071 = vrot.slane %v1070, 2
    %v1072 = vadd.s32 %v1070, %v1071
    %v1073 = vrot.slane %v1072, 1
    %v1074 = vadd.s32 %v1072, %v1073
    %s1075 = vtos %v1074
    %v1076 = vstv %s1075
    %vm1077 = vcmp.le.s32.totalorder %v1076, 511
    %v1078 = vsel %vm1077, %v1041, %v1040
    %v1079 = vor.u32 %v1078, 256
    %vm1080 = vcmp.lt.s32.totalorder %v235, %v1079
    %vm1081 = vcmp.lt.s32.totalorder %v236, %v1079
    %vm1082 = vcmp.lt.s32.totalorder %v237, %v1079
    %vm1083 = vcmp.lt.s32.totalorder %v238, %v1079
    %v1084 = vsel %vm1080, 1, 0
    %v1085 = vsel %vm1081, 1, 0
    %v1086 = vsel %vm1082, 1, 0
    %v1087 = vsel %vm1083, 1, 0
    %v1088 = vsel %vm251, %v1084, 0
    %v1089 = vsel %vm251, %v1085, 0
    %v1090 = vsel %vm251, %v1086, 0
    %v1091 = vsel %vm251, %v1087, 0
    %v1092 = vadd.s32 %v1088, %v1089
    %v1093 = vadd.s32 %v1090, %v1091
    %v1094 = vadd.s32 %v1092, %v1093
    %v1095 = vand.u32 %v1094, 65535
    %v1096 = vshrl.u32 %v1094, 16
    %v1097 = vcvt.s32.f32 %v1095
    %v1098 = vcvt.s32.f32 %v1096
    %1099 = vadd.xlane.f32.xlu0 %v1097
    %v1100 = vpop.xlane.xlu0 %1099
    %1101 = vadd.xlane.f32.xlu0 %v1098
    %v1102 = vpop.xlane.xlu0 %1101
    %v1103 = vcvt.f32.s32 %v1100
    %v1104 = vcvt.f32.s32 %v1102
    %v1105 = vshll.u32 %v1104, 16
    %v1106 = vadd.s32 %v1105, %v1103
    %v1107 = vrot.slane %v1106, 4
    %v1108 = vadd.s32 %v1106, %v1107
    %v1109 = vrot.slane %v1108, 2
    %v1110 = vadd.s32 %v1108, %v1109
    %v1111 = vrot.slane %v1110, 1
    %v1112 = vadd.s32 %v1110, %v1111
    %s1113 = vtos %v1112
    %v1114 = vstv %s1113
    %vm1115 = vcmp.le.s32.totalorder %v1114, 511
    %v1116 = vsel %vm1115, %v1079, %v1078
    %v1117 = vor.u32 %v1116, 128
    %vm1118 = vcmp.lt.s32.totalorder %v235, %v1117
    %vm1119 = vcmp.lt.s32.totalorder %v236, %v1117
    %vm1120 = vcmp.lt.s32.totalorder %v237, %v1117
    %vm1121 = vcmp.lt.s32.totalorder %v238, %v1117
    %v1122 = vsel %vm1118, 1, 0
    %v1123 = vsel %vm1119, 1, 0
    %v1124 = vsel %vm1120, 1, 0
    %v1125 = vsel %vm1121, 1, 0
    %v1126 = vsel %vm251, %v1122, 0
    %v1127 = vsel %vm251, %v1123, 0
    %v1128 = vsel %vm251, %v1124, 0
    %v1129 = vsel %vm251, %v1125, 0
    %v1130 = vadd.s32 %v1126, %v1127
    %v1131 = vadd.s32 %v1128, %v1129
    %v1132 = vadd.s32 %v1130, %v1131
    %v1133 = vand.u32 %v1132, 65535
    %v1134 = vshrl.u32 %v1132, 16
    %v1135 = vcvt.s32.f32 %v1133
    %v1136 = vcvt.s32.f32 %v1134
    %1137 = vadd.xlane.f32.xlu0 %v1135
    %v1138 = vpop.xlane.xlu0 %1137
    %1139 = vadd.xlane.f32.xlu0 %v1136
    %v1140 = vpop.xlane.xlu0 %1139
    %v1141 = vcvt.f32.s32 %v1138
    %v1142 = vcvt.f32.s32 %v1140
    %v1143 = vshll.u32 %v1142, 16
    %v1144 = vadd.s32 %v1143, %v1141
    %v1145 = vrot.slane %v1144, 4
    %v1146 = vadd.s32 %v1144, %v1145
    %v1147 = vrot.slane %v1146, 2
    %v1148 = vadd.s32 %v1146, %v1147
    %v1149 = vrot.slane %v1148, 1
    %v1150 = vadd.s32 %v1148, %v1149
    %s1151 = vtos %v1150
    %v1152 = vstv %s1151
    %vm1153 = vcmp.le.s32.totalorder %v1152, 511
    %v1154 = vsel %vm1153, %v1117, %v1116
    %v1155 = vor.u32 %v1154, 64
    %vm1156 = vcmp.lt.s32.totalorder %v235, %v1155
    %vm1157 = vcmp.lt.s32.totalorder %v236, %v1155
    %vm1158 = vcmp.lt.s32.totalorder %v237, %v1155
    %vm1159 = vcmp.lt.s32.totalorder %v238, %v1155
    %v1160 = vsel %vm1156, 1, 0
    %v1161 = vsel %vm1157, 1, 0
    %v1162 = vsel %vm1158, 1, 0
    %v1163 = vsel %vm1159, 1, 0
    %v1164 = vsel %vm251, %v1160, 0
    %v1165 = vsel %vm251, %v1161, 0
    %v1166 = vsel %vm251, %v1162, 0
    %v1167 = vsel %vm251, %v1163, 0
    %v1168 = vadd.s32 %v1164, %v1165
    %v1169 = vadd.s32 %v1166, %v1167
    %v1170 = vadd.s32 %v1168, %v1169
    %v1171 = vand.u32 %v1170, 65535
    %v1172 = vshrl.u32 %v1170, 16
    %v1173 = vcvt.s32.f32 %v1171
    %v1174 = vcvt.s32.f32 %v1172
    %1175 = vadd.xlane.f32.xlu0 %v1173
    %v1176 = vpop.xlane.xlu0 %1175
    %1177 = vadd.xlane.f32.xlu0 %v1174
    %v1178 = vpop.xlane.xlu0 %1177
    %v1179 = vcvt.f32.s32 %v1176
    %v1180 = vcvt.f32.s32 %v1178
    %v1181 = vshll.u32 %v1180, 16
    %v1182 = vadd.s32 %v1181, %v1179
    %v1183 = vrot.slane %v1182, 4
    %v1184 = vadd.s32 %v1182, %v1183
    %v1185 = vrot.slane %v1184, 2
    %v1186 = vadd.s32 %v1184, %v1185
    %v1187 = vrot.slane %v1186, 1
    %v1188 = vadd.s32 %v1186, %v1187
    %s1189 = vtos %v1188
    %v1190 = vstv %s1189
    %vm1191 = vcmp.le.s32.totalorder %v1190, 511
    %v1192 = vsel %vm1191, %v1155, %v1154
    %v1193 = vor.u32 %v1192, 32
    %vm1194 = vcmp.lt.s32.totalorder %v235, %v1193
    %vm1195 = vcmp.lt.s32.totalorder %v236, %v1193
    %vm1196 = vcmp.lt.s32.totalorder %v237, %v1193
    %vm1197 = vcmp.lt.s32.totalorder %v238, %v1193
    %v1198 = vsel %vm1194, 1, 0
    %v1199 = vsel %vm1195, 1, 0
    %v1200 = vsel %vm1196, 1, 0
    %v1201 = vsel %vm1197, 1, 0
    %v1202 = vsel %vm251, %v1198, 0
    %v1203 = vsel %vm251, %v1199, 0
    %v1204 = vsel %vm251, %v1200, 0
    %v1205 = vsel %vm251, %v1201, 0
    %v1206 = vadd.s32 %v1202, %v1203
    %v1207 = vadd.s32 %v1204, %v1205
    %v1208 = vadd.s32 %v1206, %v1207
    %v1209 = vand.u32 %v1208, 65535
    %v1210 = vshrl.u32 %v1208, 16
    %v1211 = vcvt.s32.f32 %v1209
    %v1212 = vcvt.s32.f32 %v1210
    %1213 = vadd.xlane.f32.xlu0 %v1211
    %v1214 = vpop.xlane.xlu0 %1213
    %1215 = vadd.xlane.f32.xlu0 %v1212
    %v1216 = vpop.xlane.xlu0 %1215
    %v1217 = vcvt.f32.s32 %v1214
    %v1218 = vcvt.f32.s32 %v1216
    %v1219 = vshll.u32 %v1218, 16
    %v1220 = vadd.s32 %v1219, %v1217
    %v1221 = vrot.slane %v1220, 4
    %v1222 = vadd.s32 %v1220, %v1221
    %v1223 = vrot.slane %v1222, 2
    %v1224 = vadd.s32 %v1222, %v1223
    %v1225 = vrot.slane %v1224, 1
    %v1226 = vadd.s32 %v1224, %v1225
    %s1227 = vtos %v1226
    %v1228 = vstv %s1227
    %vm1229 = vcmp.le.s32.totalorder %v1228, 511
    %v1230 = vsel %vm1229, %v1193, %v1192
    %v1231 = vor.u32 %v1230, 16
    %vm1232 = vcmp.lt.s32.totalorder %v235, %v1231
    %vm1233 = vcmp.lt.s32.totalorder %v236, %v1231
    %vm1234 = vcmp.lt.s32.totalorder %v237, %v1231
    %vm1235 = vcmp.lt.s32.totalorder %v238, %v1231
    %v1236 = vsel %vm1232, 1, 0
    %v1237 = vsel %vm1233, 1, 0
    %v1238 = vsel %vm1234, 1, 0
    %v1239 = vsel %vm1235, 1, 0
    %v1240 = vsel %vm251, %v1236, 0
    %v1241 = vsel %vm251, %v1237, 0
    %v1242 = vsel %vm251, %v1238, 0
    %v1243 = vsel %vm251, %v1239, 0
    %v1244 = vadd.s32 %v1240, %v1241
    %v1245 = vadd.s32 %v1242, %v1243
    %v1246 = vadd.s32 %v1244, %v1245
    %v1247 = vand.u32 %v1246, 65535
    %v1248 = vshrl.u32 %v1246, 16
    %v1249 = vcvt.s32.f32 %v1247
    %v1250 = vcvt.s32.f32 %v1248
    %1251 = vadd.xlane.f32.xlu0 %v1249
    %v1252 = vpop.xlane.xlu0 %1251
    %1253 = vadd.xlane.f32.xlu0 %v1250
    %v1254 = vpop.xlane.xlu0 %1253
    %v1255 = vcvt.f32.s32 %v1252
    %v1256 = vcvt.f32.s32 %v1254
    %v1257 = vshll.u32 %v1256, 16
    %v1258 = vadd.s32 %v1257, %v1255
    %v1259 = vrot.slane %v1258, 4
    %v1260 = vadd.s32 %v1258, %v1259
    %v1261 = vrot.slane %v1260, 2
    %v1262 = vadd.s32 %v1260, %v1261
    %v1263 = vrot.slane %v1262, 1
    %v1264 = vadd.s32 %v1262, %v1263
    %s1265 = vtos %v1264
    %v1266 = vstv %s1265
    %vm1267 = vcmp.le.s32.totalorder %v1266, 511
    %v1268 = vsel %vm1267, %v1231, %v1230
    %v1269 = vor.u32 %v1268, 8
    %vm1270 = vcmp.lt.s32.totalorder %v235, %v1269
    %vm1271 = vcmp.lt.s32.totalorder %v236, %v1269
    %vm1272 = vcmp.lt.s32.totalorder %v237, %v1269
    %vm1273 = vcmp.lt.s32.totalorder %v238, %v1269
    %v1274 = vsel %vm1270, 1, 0
    %v1275 = vsel %vm1271, 1, 0
    %v1276 = vsel %vm1272, 1, 0
    %v1277 = vsel %vm1273, 1, 0
    %v1278 = vsel %vm251, %v1274, 0
    %v1279 = vsel %vm251, %v1275, 0
    %v1280 = vsel %vm251, %v1276, 0
    %v1281 = vsel %vm251, %v1277, 0
    %v1282 = vadd.s32 %v1278, %v1279
    %v1283 = vadd.s32 %v1280, %v1281
    %v1284 = vadd.s32 %v1282, %v1283
    %v1285 = vand.u32 %v1284, 65535
    %v1286 = vshrl.u32 %v1284, 16
    %v1287 = vcvt.s32.f32 %v1285
    %v1288 = vcvt.s32.f32 %v1286
    %1289 = vadd.xlane.f32.xlu0 %v1287
    %v1290 = vpop.xlane.xlu0 %1289
    %1291 = vadd.xlane.f32.xlu0 %v1288
    %v1292 = vpop.xlane.xlu0 %1291
    %v1293 = vcvt.f32.s32 %v1290
    %v1294 = vcvt.f32.s32 %v1292
    %v1295 = vshll.u32 %v1294, 16
    %v1296 = vadd.s32 %v1295, %v1293
    %v1297 = vrot.slane %v1296, 4
    %v1298 = vadd.s32 %v1296, %v1297
    %v1299 = vrot.slane %v1298, 2
    %v1300 = vadd.s32 %v1298, %v1299
    %v1301 = vrot.slane %v1300, 1
    %v1302 = vadd.s32 %v1300, %v1301
    %s1303 = vtos %v1302
    %v1304 = vstv %s1303
    %vm1305 = vcmp.le.s32.totalorder %v1304, 511
    %v1306 = vsel %vm1305, %v1269, %v1268
    %v1307 = vor.u32 %v1306, 4
    %vm1308 = vcmp.lt.s32.totalorder %v235, %v1307
    %vm1309 = vcmp.lt.s32.totalorder %v236, %v1307
    %vm1310 = vcmp.lt.s32.totalorder %v237, %v1307
    %vm1311 = vcmp.lt.s32.totalorder %v238, %v1307
    %v1312 = vsel %vm1308, 1, 0
    %v1313 = vsel %vm1309, 1, 0
    %v1314 = vsel %vm1310, 1, 0
    %v1315 = vsel %vm1311, 1, 0
    %v1316 = vsel %vm251, %v1312, 0
    %v1317 = vsel %vm251, %v1313, 0
    %v1318 = vsel %vm251, %v1314, 0
    %v1319 = vsel %vm251, %v1315, 0
    %v1320 = vadd.s32 %v1316, %v1317
    %v1321 = vadd.s32 %v1318, %v1319
    %v1322 = vadd.s32 %v1320, %v1321
    %v1323 = vand.u32 %v1322, 65535
    %v1324 = vshrl.u32 %v1322, 16
    %v1325 = vcvt.s32.f32 %v1323
    %v1326 = vcvt.s32.f32 %v1324
    %1327 = vadd.xlane.f32.xlu0 %v1325
    %v1328 = vpop.xlane.xlu0 %1327
    %1329 = vadd.xlane.f32.xlu0 %v1326
    %v1330 = vpop.xlane.xlu0 %1329
    %v1331 = vcvt.f32.s32 %v1328
    %v1332 = vcvt.f32.s32 %v1330
    %v1333 = vshll.u32 %v1332, 16
    %v1334 = vadd.s32 %v1333, %v1331
    %v1335 = vrot.slane %v1334, 4
    %v1336 = vadd.s32 %v1334, %v1335
    %v1337 = vrot.slane %v1336, 2
    %v1338 = vadd.s32 %v1336, %v1337
    %v1339 = vrot.slane %v1338, 1
    %v1340 = vadd.s32 %v1338, %v1339
    %s1341 = vtos %v1340
    %v1342 = vstv %s1341
    %vm1343 = vcmp.le.s32.totalorder %v1342, 511
    %v1344 = vsel %vm1343, %v1307, %v1306
    %v1345 = vor.u32 %v1344, 2
    %vm1346 = vcmp.lt.s32.totalorder %v235, %v1345
    %vm1347 = vcmp.lt.s32.totalorder %v236, %v1345
    %vm1348 = vcmp.lt.s32.totalorder %v237, %v1345
    %vm1349 = vcmp.lt.s32.totalorder %v238, %v1345
    %v1350 = vsel %vm1346, 1, 0
    %v1351 = vsel %vm1347, 1, 0
    %v1352 = vsel %vm1348, 1, 0
    %v1353 = vsel %vm1349, 1, 0
    %v1354 = vsel %vm251, %v1350, 0
    %v1355 = vsel %vm251, %v1351, 0
    %v1356 = vsel %vm251, %v1352, 0
    %v1357 = vsel %vm251, %v1353, 0
    %v1358 = vadd.s32 %v1354, %v1355
    %v1359 = vadd.s32 %v1356, %v1357
    %v1360 = vadd.s32 %v1358, %v1359
    %v1361 = vand.u32 %v1360, 65535
    %v1362 = vshrl.u32 %v1360, 16
    %v1363 = vcvt.s32.f32 %v1361
    %v1364 = vcvt.s32.f32 %v1362
    %1365 = vadd.xlane.f32.xlu0 %v1363
    %v1366 = vpop.xlane.xlu0 %1365
    %1367 = vadd.xlane.f32.xlu0 %v1364
    %v1368 = vpop.xlane.xlu0 %1367
    %v1369 = vcvt.f32.s32 %v1366
    %v1370 = vcvt.f32.s32 %v1368
    %v1371 = vshll.u32 %v1370, 16
    %v1372 = vadd.s32 %v1371, %v1369
    %v1373 = vrot.slane %v1372, 4
    %v1374 = vadd.s32 %v1372, %v1373
    %v1375 = vrot.slane %v1374, 2
    %v1376 = vadd.s32 %v1374, %v1375
    %v1377 = vrot.slane %v1376, 1
    %v1378 = vadd.s32 %v1376, %v1377
    %s1379 = vtos %v1378
    %v1380 = vstv %s1379
    %vm1381 = vcmp.le.s32.totalorder %v1380, 511
    %v1382 = vsel %vm1381, %v1345, %v1344
    %v1383 = vor.u32 %v1382, 1
    %vm1384 = vcmp.lt.s32.totalorder %v235, %v1383
    %vm1385 = vcmp.lt.s32.totalorder %v236, %v1383
    %vm1386 = vcmp.lt.s32.totalorder %v237, %v1383
    %vm1387 = vcmp.lt.s32.totalorder %v238, %v1383
    %v1388 = vsel %vm1384, 1, 0
    %v1389 = vsel %vm1385, 1, 0
    %v1390 = vsel %vm1386, 1, 0
    %v1391 = vsel %vm1387, 1, 0
    %v1392 = vsel %vm251, %v1388, 0
    %v1393 = vsel %vm251, %v1389, 0
    %v1394 = vsel %vm251, %v1390, 0
    %v1395 = vsel %vm251, %v1391, 0
    %v1396 = vadd.s32 %v1392, %v1393
    %v1397 = vadd.s32 %v1394, %v1395
    %v1398 = vadd.s32 %v1396, %v1397
    %v1399 = vand.u32 %v1398, 65535
    %v1400 = vshrl.u32 %v1398, 16
    %v1401 = vcvt.s32.f32 %v1399
    %v1402 = vcvt.s32.f32 %v1400
    %1403 = vadd.xlane.f32.xlu0 %v1401
    %v1404 = vpop.xlane.xlu0 %1403
    %1405 = vadd.xlane.f32.xlu0 %v1402
    %v1406 = vpop.xlane.xlu0 %1405
    %v1407 = vcvt.f32.s32 %v1404
    %v1408 = vcvt.f32.s32 %v1406
    %v1409 = vshll.u32 %v1408, 16
    %v1410 = vadd.s32 %v1409, %v1407
    %v1411 = vrot.slane %v1410, 4
    %v1412 = vadd.s32 %v1410, %v1411
    %v1413 = vrot.slane %v1412, 2
    %v1414 = vadd.s32 %v1412, %v1413
    %v1415 = vrot.slane %v1414, 1
    %v1416 = vadd.s32 %v1414, %v1415
    %s1417 = vtos %v1416
    %v1418 = vstv %s1417
    %vm1419 = vcmp.le.s32.totalorder %v1418, 511
    %v1420 = vsel %vm1419, %v1383, %v1382
    %v1422 = vmul.f32 %v1420, 0.15
    %v1423 = vmax.f32 %v1422, 1e-09
    %v1424 = vrcp.pop %v1423
    %v1425 = vmul.f32 -0.5, %v1424
    %v1426 = vmul.f32 %v235, %v1425
    %v1427 = vmul.f32 %v236, %v1425
    %v1428 = vmul.f32 %v237, %v1425
    %v1429 = vmul.f32 %v238, %v1425
    %v1430 = vmul.f32 %v1426, 1.442695
    %v1431 = vpow.pop %v1430
    %v1432 = vmul.f32 %v1427, 1.442695
    %v1433 = vpow.pop %v1432
    %v1434 = vmul.f32 %v1428, 1.442695
    %v1435 = vpow.pop %v1434
    %v1436 = vmul.f32 %v1429, 1.442695
    %v1437 = vpow.pop %v1436
    %v1438 = vmul.f32 %v16, %v16
    %v1439 = vmul.f32 %v17, %v17
    %v1440 = vmul.f32 %v18, %v18
    %v1441 = vmul.f32 %v19, %v19
    %vm1442 = vcmask 31744
    %v1443 = vsel %vm1442, %v1438, 0.0
    %1444 = vadd.xlane.f32.xlu0 %v1443
    %v1445 = vpop.xlane.xlu0 %1444
    %v1446 = vsel %vm1442, %v1439, 0.0
    %1447 = vadd.xlane.f32.xlu0 %v1446
    %v1448 = vpop.xlane.xlu0 %1447
    %v1449 = vsel %vm1442, %v1440, 0.0
    %1450 = vadd.xlane.f32.xlu0 %v1449
    %v1451 = vpop.xlane.xlu0 %1450
    %v1452 = vsel %vm1442, %v1441, 0.0
    %1453 = vadd.xlane.f32.xlu0 %v1452
    %v1454 = vpop.xlane.xlu0 %1453
    %v1455 = vmul.f32 %v16, 2.0
    %v1456 = vmul.f32 %v17, 2.0
    %v1457 = vmul.f32 %v18, 2.0
    %v1458 = vmul.f32 %v19, 2.0
    %v1459 = vsub.f32 %v1445, %v1455
    %v1460 = vsub.f32 %v1448, %v1456
    %v1461 = vsub.f32 %v1451, %v1457
    %v1462 = vsub.f32 %v1454, %v1458
    %v1463 = vadd.f32 %v1459, 1.0
    %v1464 = vadd.f32 %v1460, 1.0
    %v1465 = vadd.f32 %v1461, 1.0
    %v1466 = vadd.f32 %v1462, 1.0
    %v1467 = vsub.f32 0.0, %v1463
    %v1468 = vsub.f32 0.0, %v1464
    %v1469 = vsub.f32 0.0, %v1465
    %v1470 = vsub.f32 0.0, %v1466
    %v1471 = vmul.f32 %v1467, 1.442695
    %v1472 = vpow.pop %v1471
    %v1473 = vmul.f32 %v1468, 1.442695
    %v1474 = vpow.pop %v1473
    %v1475 = vmul.f32 %v1469, 1.442695
    %v1476 = vpow.pop %v1475
    %v1477 = vmul.f32 %v1470, 1.442695
    %v1478 = vpow.pop %v1477
    %1483 = vrot.lane.b32.xlu0 %v1472, 4
    %v1484 = vpop.permute.xlu0 %1483
    %1485 = vrot.lane.b32.xlu0 %v1474, 4
    %v1486 = vpop.permute.xlu0 %1485
    %1487 = vrot.lane.b32.xlu0 %v1476, 4
    %v1488 = vpop.permute.xlu0 %1487
    %1489 = vrot.lane.b32.xlu0 %v1478, 4
    %v1490 = vpop.permute.xlu0 %1489
    %v1495 = vsel %vm1442, %v16, %v1484
    %v1496 = vsel %vm1442, %v17, %v1486
    %v1497 = vsel %vm1442, %v18, %v1488
    %v1498 = vsel %vm1442, %v19, %v1490
    %v1500 = vsel %vm251, %v1431, 0
    %v1503 = vsel %vm251, %v1433, 0
    %v1506 = vsel %vm251, %v1435, 0
    %v1509 = vsel %vm251, %v1437, 0
    %1511 = vmatprep.subr.mxu0 0.0
    %1512 = vmatpush1.msra.mxu0 %v1495
    %1513 = vmatprep.subr.mxu0 0.0
    %1514 = vmatpush1.msra.mxu0 %v1496
    %1515 = vmatprep.subr.mxu0 0.0
    %1516 = vmatpush1.msra.mxu0 %v1497
    %1517 = vmatprep.subr.mxu0 0.0
    %1518 = vmatpush1.msra.mxu0 %v1498
    %1519 = vmatprep.subr.mxu0 0.0
    %1520 = vmatpush1.msra.mxu0 0.0
    %1521 = vmatprep.subr.mxu0 0.0
    %1522 = vmatpush1.msra.mxu0 0.0
    %1523 = vmatprep.subr.mxu0 0.0
    %1524 = vmatpush1.msra.mxu0 0.0
    %1525 = vmatprep.subr.mxu0 0.0
    %1526 = vmatpush1.msra.mxu0 0.0
    %1527 = vmatprep.subr.mxu0 0.0
    %1528 = vmatpush1.msra.mxu0 0.0
    %1529 = vmatprep.subr.mxu0 0.0
    %1530 = vmatpush1.msra.mxu0 0.0
    %1531 = vmatprep.subr.mxu0 0.0
    %1532 = vmatpush1.msra.mxu0 0.0
    %1533 = vmatprep.subr.mxu0 0.0
    %1534 = vmatpush1.msra.mxu0 0.0
    %1535 = vmatprep.subr.mxu0 0.0
    %1536 = vmatpush1.msra.mxu0 0.0
    %1537 = vmatprep.subr.mxu0 0.0
    %1538 = vmatpush1.msra.mxu0 0.0
    %1539 = vmatprep.subr.mxu0 0.0
    %1540 = vmatpush1.msra.mxu0 0.0
    %1541 = vmatprep.subr.mxu0 0.0
    %1542 = vmatpush1.msra.mxu0 0.0
    %1543 = vmatprep.subr.mxu0 0.0
    %1544 = vmatpush1.msra.mxu0 0.0
    %1545 = vmatprep.subr.mxu0 0.0
    %1546 = vmatpush1.msra.mxu0 0.0
    %1547 = vmatprep.subr.mxu0 0.0
    %1548 = vmatpush1.msra.mxu0 0.0
    %1549 = vmatprep.subr.mxu0 0.0
    %1550 = vmatpush1.msra.mxu0 0.0
    %1551 = vmatprep.subr.mxu0 0.0
    %1552 = vmatpush1.msra.mxu0 0.0
    %1553 = vmatprep.subr.mxu0 0.0
    %1554 = vmatpush1.msra.mxu0 0.0
    %1555 = vmatprep.subr.mxu0 0.0
    %1556 = vmatpush1.msra.mxu0 0.0
    %1557 = vmatprep.subr.mxu0 0.0
    %1558 = vmatpush1.msra.mxu0 0.0
    %1559 = vmatprep.subr.mxu0 0.0
    %1560 = vmatpush1.msra.mxu0 0.0
    %1561 = vmatprep.subr.mxu0 0.0
    %1562 = vmatpush1.msra.mxu0 0.0
    %1563 = vmatprep.subr.mxu0 0.0
    %1564 = vmatpush1.msra.mxu0 0.0
    %1565 = vmatprep.subr.mxu0 0.0
    %1566 = vmatpush1.msra.mxu0 0.0
    %1567 = vmatprep.subr.mxu0 0.0
    %1568 = vmatpush1.msra.mxu0 0.0
    %1569 = vmatprep.subr.mxu0 0.0
    %1570 = vmatpush1.msra.mxu0 0.0
    %1571 = vmatprep.subr.mxu0 0.0
    %1572 = vmatpush1.msra.mxu0 0.0
    %1573 = vmatprep.subr.mxu0 0.0
    %1574 = vmatpush1.msra.mxu0 0.0
    %1575 = vmatprep.mubr.f32.mxu0 0.0
    %1576 = vmatmul.mubr.f32.gmra.mrb[0].mxu0 %v1500
    %v1577 = vpop.f32.mrb[0].mxu0
    %v1578 = vadd.f32 0.0, %v1577
    %v1579 = vpop.f32.mrb[0].mxu0
    %1580 = vmatprep.mubr.f32.mxu0 0.0
    %1581 = vmatmul.mubr.f32.gmra.mrb[0].mxu0 %v1503
    %v1582 = vpop.f32.mrb[0].mxu0
    %v1583 = vadd.f32 0.0, %v1582
    %v1584 = vpop.f32.mrb[0].mxu0
    %1585 = vmatprep.mubr.f32.mxu0 0.0
    %1586 = vmatmul.mubr.f32.gmra.mrb[0].mxu0 %v1506
    %v1587 = vpop.f32.mrb[0].mxu0
    %v1588 = vadd.f32 0.0, %v1587
    %v1589 = vpop.f32.mrb[0].mxu0
    %1590 = vmatprep.mubr.f32.mxu0 0.0
    %1591 = vmatmul.mubr.f32.gmra.mrb[0].mxu0 %v1509
    %v1592 = vpop.f32.mrb[0].mxu0
    %v1593 = vadd.f32 0.0, %v1592
    %v1594 = vpop.f32.mrb[0].mxu0
    %1595 = vdwg.mxu0
    %1596 = vxpose.xlu0.b32.start [1/16] %v1495, 128
    %1597 = vxpose.xlu0.b32.cont [2/16] %v1496, 128
    %1598 = vxpose.xlu0.b32.cont [3/16] %v1497, 128
    %1599 = vxpose.xlu0.b32.cont [4/16] %v1498, 128
    %1600 = vxpose.xlu0.b32.cont [5/16] 0.0, 128
    %1601 = vxpose.xlu0.b32.cont [6/16] 0.0, 128
    %1602 = vxpose.xlu0.b32.cont [7/16] 0.0, 128
    %1603 = vxpose.xlu0.b32.cont [8/16] 0.0, 128
    %1604 = vxpose.xlu0.b32.cont [9/16] 0.0, 128
    %1605 = vxpose.xlu0.b32.cont [10/16] 0.0, 128
    %1606 = vxpose.xlu0.b32.cont [11/16] 0.0, 128
    %1607 = vxpose.xlu0.b32.cont [12/16] 0.0, 128
    %1608 = vxpose.xlu0.b32.cont [13/16] 0.0, 128
    %1609 = vxpose.xlu0.b32.cont [14/16] 0.0, 128
    %1610 = vxpose.xlu0.b32.cont [15/16] 0.0, 128
    %1611 = vxpose.xlu0.b32.end [16/16] 0.0, 128
    %v1612 = vpop.trf.xlu0
    %v1613 = vpop.trf.xlu0
    %v1614 = vpop.trf.xlu0
    %v1615 = vpop.trf.xlu0
    %v1616 = vpop.trf.xlu0
    %v1617 = vpop.trf.xlu0
    %v1618 = vpop.trf.xlu0
    %v1619 = vpop.trf.xlu0
    %v1620 = vpop.trf.xlu0
    %v1621 = vpop.trf.xlu0
    %v1622 = vpop.trf.xlu0
    %v1623 = vpop.trf.xlu0
    %v1624 = vpop.trf.xlu0
    %v1625 = vpop.trf.xlu0
    %v1626 = vpop.trf.xlu0
    %v1627 = vpop.trf.xlu0
    %v1629 = vsel %vm251, %v1612, 0
    %1631 = vmatprep.subr.mxu0 0.0
    %1632 = vmatpush1.msra.mxu0 %v1578
    %1633 = vmatprep.subr.mxu0 0.0
    %1634 = vmatpush1.msra.mxu0 %v1583
    %1635 = vmatprep.subr.mxu0 0.0
    %1636 = vmatpush1.msra.mxu0 %v1588
    %1637 = vmatprep.subr.mxu0 0.0
    %1638 = vmatpush1.msra.mxu0 %v1593
    %1639 = vmatprep.subr.mxu0 0.0
    %1640 = vmatpush1.msra.mxu0 0.0
    %1641 = vmatprep.subr.mxu0 0.0
    %1642 = vmatpush1.msra.mxu0 0.0
    %1643 = vmatprep.subr.mxu0 0.0
    %1644 = vmatpush1.msra.mxu0 0.0
    %1645 = vmatprep.subr.mxu0 0.0
    %1646 = vmatpush1.msra.mxu0 0.0
    %1647 = vmatprep.subr.mxu0 0.0
    %1648 = vmatpush1.msra.mxu0 0.0
    %1649 = vmatprep.subr.mxu0 0.0
    %1650 = vmatpush1.msra.mxu0 0.0
    %1651 = vmatprep.subr.mxu0 0.0
    %1652 = vmatpush1.msra.mxu0 0.0
    %1653 = vmatprep.subr.mxu0 0.0
    %1654 = vmatpush1.msra.mxu0 0.0
    %1655 = vmatprep.subr.mxu0 0.0
    %1656 = vmatpush1.msra.mxu0 0.0
    %1657 = vmatprep.subr.mxu0 0.0
    %1658 = vmatpush1.msra.mxu0 0.0
    %1659 = vmatprep.subr.mxu0 0.0
    %1660 = vmatpush1.msra.mxu0 0.0
    %1661 = vmatprep.subr.mxu0 0.0
    %1662 = vmatpush1.msra.mxu0 0.0
    %1663 = vmatprep.subr.mxu0 0.0
    %1664 = vmatpush1.msra.mxu0 0.0
    %1665 = vmatprep.subr.mxu0 0.0
    %1666 = vmatpush1.msra.mxu0 0.0
    %1667 = vmatprep.subr.mxu0 0.0
    %1668 = vmatpush1.msra.mxu0 0.0
    %1669 = vmatprep.subr.mxu0 0.0
    %1670 = vmatpush1.msra.mxu0 0.0
    %1671 = vmatprep.subr.mxu0 0.0
    %1672 = vmatpush1.msra.mxu0 0.0
    %1673 = vmatprep.subr.mxu0 0.0
    %1674 = vmatpush1.msra.mxu0 0.0
    %1675 = vmatprep.subr.mxu0 0.0
    %1676 = vmatpush1.msra.mxu0 0.0
    %1677 = vmatprep.subr.mxu0 0.0
    %1678 = vmatpush1.msra.mxu0 0.0
    %1679 = vmatprep.subr.mxu0 0.0
    %1680 = vmatpush1.msra.mxu0 0.0
    %1681 = vmatprep.subr.mxu0 0.0
    %1682 = vmatpush1.msra.mxu0 0.0
    %1683 = vmatprep.subr.mxu0 0.0
    %1684 = vmatpush1.msra.mxu0 0.0
    %1685 = vmatprep.subr.mxu0 0.0
    %1686 = vmatpush1.msra.mxu0 0.0
    %1687 = vmatprep.subr.mxu0 0.0
    %1688 = vmatpush1.msra.mxu0 0.0
    %1689 = vmatprep.subr.mxu0 0.0
    %1690 = vmatpush1.msra.mxu0 0.0
    %1691 = vmatprep.subr.mxu0 0.0
    %1692 = vmatpush1.msra.mxu0 0.0
    %1693 = vmatprep.subr.mxu0 0.0
    %1694 = vmatpush1.msra.mxu0 0.0
    %1695 = vmatprep.mubr.f32.mxu0 0.0
    %1696 = vmatmul.mubr.f32.gmra.mrb[0].mxu0 %v1629
    %v1697 = vpop.f32.mrb[0].mxu0
    %v1698 = vadd.f32 0.0, %v1697
    %v1699 = vpop.f32.mrb[0].mxu0
    %1700 = vdwg.mxu0
    %v1701 = vmul.f32 %v1495, %v1578
    %v1702 = vmul.f32 %v1496, %v1583
    %v1703 = vmul.f32 %v1497, %v1588
    %v1704 = vmul.f32 %v1498, %v1593
    %vm1705 = vcmask 64512
    %v1706 = vsel %vm1705, %v1701, 0.0
    %v1707 = vsel %vm1705, %v1702, 0.0
    %v1708 = vadd.f32 %v1706, %v1707
    %v1709 = vsel %vm1705, %v1703, 0.0
    %v1710 = vadd.f32 %v1708, %v1709
    %v1711 = vsel %vm1705, %v1704, 0.0
    %v1712 = vadd.f32 %v1710, %v1711
    %v1713 = vrot.slane %v1712, 4
    %v1714 = vadd.f32 %v1712, %v1713
    %v1715 = vrot.slane %v1714, 2
    %v1716 = vadd.f32 %v1714, %v1715
    %v1717 = vrot.slane %v1716, 1
    %v1718 = vadd.f32 %v1716, %v1717
    %v1719 = vlaneseq
    %v1720 = vshrl.u32 %v1719, 7
    %v1721 = vlaneseq
    %v1722 = vand.u32 %v1721, 127
    %vm1723 = vcmp.eq.s32.totalorder %v1720, %v1722
    %v1724 = vsel %vm1723, 1, 0
    %v1725 = vcvt.s32.f32 %v1724
    %v1726 = vmul.f32 %v1698, %v1725
    %v1727 = vsel %vm1705, %v1726, 0.0
    %1728 = vadd.xlane.f32.xlu0 %v1727
    %v1729 = vpop.xlane.xlu0 %1728
    %v1730 = vmul.f32 %v1729, %v1718
    %vm1731 = vcmp.lt.f32.partialorder %v1698, 1e-09
    %v1732 = vsel %vm1731, 1e-09, %v1698
    %vm1733 = vcmp.lt.f32.partialorder %v1730, 1e-18
    %v1734 = vsel %vm1733, 1e-18, %v1730
    %v1735 = vrsqrt.pop %v1734
    %v1736 = vmul.f32 %v1732, %v1735
    %vm1737 = vcmp.lt.f32.partialorder %v1718, 1e-09
    %v1738 = vsel %vm1737, 1e-09, %v1718
    %v1739 = vmul.f32 %v1718, %v1718
    %vm1740 = vcmp.lt.f32.partialorder %v1739, 1e-18
    %v1741 = vsel %vm1740, 1e-18, %v1739
    %v1742 = vrsqrt.pop %v1741
    %v1743 = vmul.f32 %v1738, %v1742
    %vm1744 = vcmask 27648
    %v1745 = vsel %vm1744, %v1736, 0.0
    %1746 = vadd.xlane.f32.xlu0 %v1745
    %v1747 = vpop.xlane.xlu0 %1746
    %v1748 = vrot.slane %v1747, 4
    %v1749 = vadd.f32 %v1747, %v1748
    %v1750 = vrot.slane %v1749, 2
    %v1751 = vadd.f32 %v1749, %v1750
    %v1752 = vrot.slane %v1751, 1
    %v1753 = vadd.f32 %v1751, %v1752
    %s1754 = vtos %v1753
    %v1755 = vstv %s1754
    %vm1756 = vcmask 24576
    %v1757 = vsel %vm1756, %v1743, 0.0
    %1758 = vadd.xlane.f32.xlu0 %v1757
    %v1759 = vpop.xlane.xlu0 %1758
    %v1760 = vrot.slane %v1759, 4
    %v1761 = vadd.f32 %v1759, %v1760
    %v1762 = vrot.slane %v1761, 2
    %v1763 = vadd.f32 %v1761, %v1762
    %v1764 = vrot.slane %v1763, 1
    %v1765 = vadd.f32 %v1763, %v1764
    %s1766 = vtos %v1765
    %v1767 = vstv %s1766
    %v1768 = vsub.f32 %v1755, %v1767
    %v1769 = vrcp.pop 12.0
    %v1770 = vmul.f32 %v1768, %v1769
    %v1772 = vrot.slane %v1736, 4
    %1773 = vrot.lane.b32.xlu0 %v1772, 124
    %v1774 = vpop.permute.xlu0 %1773
    %v1776 = vsel %vm1744, %v1774, 0.0
    %1777 = vadd.xlane.f32.xlu0 %v1776
    %v1778 = vpop.xlane.xlu0 %1777
    %v1779 = vrot.slane %v1778, 4
    %v1780 = vadd.f32 %v1778, %v1779
    %v1781 = vrot.slane %v1780, 2
    %v1782 = vadd.f32 %v1780, %v1781
    %v1783 = vrot.slane %v1782, 1
    %v1784 = vadd.f32 %v1782, %v1783
    %s1785 = vtos %v1784
    %v1786 = vstv %s1785
    %1788 = vrot.lane.b32.xlu0 %v1743, 124
    %v1789 = vpop.permute.xlu0 %1788
    %v1791 = vsel %vm1756, %v1789, 0.0
    %1792 = vadd.xlane.f32.xlu0 %v1791
    %v1793 = vpop.xlane.xlu0 %1792
    %v1794 = vrot.slane %v1793, 4
    %v1795 = vadd.f32 %v1793, %v1794
    %v1796 = vrot.slane %v1795, 2
    %v1797 = vadd.f32 %v1795, %v1796
    %v1798 = vrot.slane %v1797, 1
    %v1799 = vadd.f32 %v1797, %v1798
    %s1800 = vtos %v1799
    %v1801 = vstv %s1800
    %v1802 = vsub.f32 %v1786, %v1801
    %v1803 = vmul.f32 %v1802, %v1769
    %v1804 = vsel %vm1442, %v16, 0.0
    %v1805 = vsel %vm1442, %v17, 0.0
    %v1806 = vadd.f32 %v1804, %v1805
    %v1807 = vsel %vm1442, %v18, 0.0
    %v1808 = vadd.f32 %v1806, %v1807
    %v1809 = vsel %vm1442, %v19, 0.0
    %v1810 = vadd.f32 %v1808, %v1809
    %v1811 = vrot.slane %v1810, 4
    %v1812 = vadd.f32 %v1810, %v1811
    %v1813 = vrot.slane %v1812, 2
    %v1814 = vadd.f32 %v1812, %v1813
    %v1815 = vrot.slane %v1814, 1
    %v1816 = vadd.f32 %v1814, %v1815
    %v1817 = vmul.f32 %v1816, %v1816
    %v1818 = vsel %vm1756, %v1817, 0.0
    %1819 = vadd.xlane.f32.xlu0 %v1818
    %v1820 = vpop.xlane.xlu0 %1819
    %v1821 = vrot.slane %v1820, 4
    %v1822 = vadd.f32 %v1820, %v1821
    %v1823 = vrot.slane %v1822, 2
    %v1824 = vadd.f32 %v1822, %v1823
    %v1825 = vrot.slane %v1824, 1
    %v1826 = vadd.f32 %v1824, %v1825
    %s1827 = vtos %v1826
    %v1828 = vstv %s1827
    %v1829 = vadd.f32 %v1443, %v1446
    %v1830 = vadd.f32 %v1829, %v1449
    %v1831 = vadd.f32 %v1830, %v1452
    %1832 = vadd.xlane.f32.xlu0 %v1831
    %v1833 = vpop.xlane.xlu0 %1832
    %v1834 = vrot.slane %v1833, 4
    %v1835 = vadd.f32 %v1833, %v1834
    %v1836 = vrot.slane %v1835, 2
    %v1837 = vadd.f32 %v1835, %v1836
    %v1838 = vrot.slane %v1837, 1
    %v1839 = vadd.f32 %v1837, %v1838
    %s1840 = vtos %v1839
    %v1841 = vstv %s1840
    %v1842 = vsub.f32 %v1828, %v1841
    %v1843 = vrcp.pop 992.0
    %v1844 = vmul.f32 %v1842, %v1843
    %vm1845 = vcmp.eq.s32.totalorder %v1722, 0
    %v1846 = vsel %vm1845, 1, 0
    %v1847 = vcvt.s32.f32 %v1846
    %v1848 = vmul.f32 %v1770, %v1847
    %vm1849 = vcmp.eq.s32.totalorder %v1722, 1
    %v1850 = vsel %vm1849, 1, 0
    %v1851 = vcvt.s32.f32 %v1850
    %v1852 = vmul.f32 %v1844, %v1851
    %v1853 = vadd.f32 %v1848, %v1852
    %vm1854 = vcmp.eq.s32.totalorder %v1722, 2
    %v1855 = vsel %vm1854, 1, 0
    %v1856 = vcvt.s32.f32 %v1855
    %v1857 = vmul.f32 %v1803, %v1856
    %v1858 = vadd.f32 %v1853, %v1857
    %1859 = vst [vmem:[#allocation2] sm:$0x1] %v1858
    // Predicated region
    $region10: #{tpu_custom_call.1} parent=1 // pred_check
      _
    $region11: #{tpu_custom_call.1} parent=1 // pred_check_branch
      %1861 = sbr.rel (0) target = $region13
    $region12: #{tpu_custom_call.1} parent=1 // pred_region
      %s1863 = ssub.s32 16, 16
      %1864 = vsyncadd [#allocation3], %s1863
      %s1866 = sshll.u32 [#allocation2], 4
      %s1867 = int_to_ptr.vmem [resolvable:$true] %s1866
      %1869 = dma.vmem_to_hbm [thread:$0]  %s1867, 16, %s2, [#allocation3]
    $region13: #{tpu_custom_call.1} parent=1 // pred_fallthru
      _
    // Predicated region
    $region14: #{tpu_custom_call.1} parent=1 // pred_check
      _
    $region15: #{tpu_custom_call.1} parent=1 // pred_check_branch
      %1871 = sbr.rel (0) target = $region17
    $region16: #{tpu_custom_call.1} parent=1 // pred_region
      %1872 = dma.done [#allocation3], 16
    $region17: #{tpu_custom_call.1} parent=1 // pred_fallthru
      _
    %1873 = vsyncpa [#allocation3], 1

</llo_original>
